<compile_context>
chip_gen: v6e
topology: v6e:2x2x1
jax: 0.10.0
libtpu: 0.0.40
codegen_flags: <defaults>
</compile_context>

<pallas_src>
import functools

import jax
import jax.numpy as jnp
from jax import lax
from jax.experimental import pallas as pl
from jax.experimental.pallas import tpu as pltpu


# ----------------------------- Pallas kernel --------------------------------
def _fused_decoder_kernel(x_ref, wih1_ref, whh1_ref, b1_ref,
                          wih2_ref, whh2_ref, b2_ref, out_ref,
                          *, T, BP, H1, H2):
    """Fused 2-layer LSTM decoder (PyTorch gate order i,f,g,o), zero init.

    x_ref:    (BP, I)       latent (batch padded to a sublane multiple)
    wih1_ref: (I,  4*H1)    layer-1 input weights, transposed (gates packed)
    whh1_ref: (H1, 4*H1)    layer-1 hidden weights, transposed
    b1_ref:   (1,  4*H1)    layer-1 combined bias (b_ih + b_hh)
    wih2_ref: (H1, 4*H2)    layer-2 input weights, transposed
    whh2_ref: (H2, 4*H2)    layer-2 hidden weights, transposed
    b2_ref:   (1,  4*H2)    layer-2 combined bias
    out_ref:  (T*BP, H2)    layer-2 hidden sequence, time-major
    """
    f32 = jnp.float32

    def cell(gates, c, H):
        # One EUP tanh over the whole packed gate slab covers i/f/o sigmoids
        # (sigmoid(x) = 0.5*tanh(0.5*x)+0.5); one more tanh for the g gate and
        # one for the new cell state -> 3 EUP vreg passes per step.
        sig = 0.5 * jnp.tanh(0.5 * gates) + 0.5
        i_g = sig[:, 0 * H:1 * H]
        f_g = sig[:, 1 * H:2 * H]
        o_g = sig[:, 3 * H:4 * H]
        g_g = jnp.tanh(gates[:, 2 * H:3 * H])
        c_new = f_g * c + i_g * g_g
        h_new = o_g * jnp.tanh(c_new)
        return h_new, c_new

    # Hoisted weight / bias loads (not re-read inside the unrolled loops).
    whh1 = whh1_ref[...]
    wih2 = wih2_ref[...]
    whh2 = whh2_ref[...]
    b2 = b2_ref[...]

    # Layer-1 input projection is step-invariant (the latent is repeated along
    # time), so compute it once; the tiled (B, T, latent) input never exists.
    gx1 = (jnp.dot(x_ref[...], wih1_ref[...], preferred_element_type=f32)
           + b1_ref[...])                                        # (BP, 4*H1)

    h1 = jnp.zeros((BP, H1), f32)
    c1 = jnp.zeros((BP, H1), f32)
    h2 = jnp.zeros((BP, H2), f32)
    c2 = jnp.zeros((BP, H2), f32)

    def layer2_step(h1_t, h2, c2):
        gates2 = (jnp.dot(h1_t, wih2, preferred_element_type=f32) + b2
                  + jnp.dot(h2, whh2, preferred_element_type=f32))
        return cell(gates2, c2, H2)

    # Software-pipelined recurrences: within iteration t, the layer-1 step t
    # and layer-2 step t-1 depend only on h1_{t-1} / h2_{t-2}, so their serial
    # MXU->EUP->VPU chains are independent and can overlap. Fully unrolled
    # (T is a compile-time constant) with static, sublane-aligned stores.
    for t in range(T):
        gates1 = gx1 + jnp.dot(h1, whh1, preferred_element_type=f32)
        new_h1, c1 = cell(gates1, c1, H1)
        if t > 0:
            h2, c2 = layer2_step(h1, h2, c2)          # consumes h1_{t-1}
            out_ref[(t - 1) * BP:t * BP, :] = h2
        h1 = new_h1
    # Epilogue: final layer-2 step.
    h2, c2 = layer2_step(h1, h2, c2)
    out_ref[(T - 1) * BP:T * BP, :] = h2


# ------------------------- weight preparation --------------------------------
def _prep_lstm_weights(p):
    """PyTorch (4H,in)/(4H,H)/(4H,) params -> transposed packed-gate slabs."""
    wih = p["w_ih"].T.astype(jnp.float32)                       # (in, 4H)
    whh = p["w_hh"].T.astype(jnp.float32)                       # (H, 4H)
    b = (p["b_ih"] + p["b_hh"]).astype(jnp.float32)[None, :]    # (1, 4H)
    return wih, whh, b


# --------------------------- module forward (glue) ---------------------------
@functools.partial(jax.jit, static_argnames=("seq_len",))
def lstm_variational_decoder_forward(x, decoder_params, seq_len):
    """Mirrors LSTMVariationalDecoder.forward for a 2-LSTM decoder.

    x: (B, 1, latent_dim); decoder_params: [layer1_params, layer2_params].
    """
    assert len(decoder_params) == 2, "fused kernel covers the 2-LSTM decoder"
    B = x.shape[0]
    latent = x.shape[-1]
    p1, p2 = decoder_params
    H1 = p1["w_hh"].shape[1]
    H2 = p2["w_hh"].shape[1]
    T = seq_len
    BP = ((B + 7) // 8) * 8  # pad batch to a sublane multiple

    wih1, whh1, b1 = _prep_lstm_weights(p1)   # (latent,4H1), (H1,4H1), (1,4H1)
    wih2, whh2, b2 = _prep_lstm_weights(p2)   # (H1,4H2), (H2,4H2), (1,4H2)

    # Latent as 2-D; padded batch rows never mix into real rows (no cross-row
    # coupling in an LSTM) and are sliced off below.
    x2d = jnp.pad(x.reshape(B, latent).astype(jnp.float32),
                  ((0, BP - B), (0, 0)))

    kernel = functools.partial(_fused_decoder_kernel, T=T, BP=BP, H1=H1, H2=H2)

    flops = 2 * BP * (latent * 4 * H1
                      + T * (H1 * 4 * H1 + H1 * 4 * H2 + H2 * 4 * H2))
    transcendentals = T * BP * 6 * (H1 + H2)
    nbytes = 4 * (x2d.size + wih1.size + whh1.size + b1.size
                  + wih2.size + whh2.size + b2.size + T * BP * H2)

    out = pl.pallas_call(
        kernel,
        out_shape=jax.ShapeDtypeStruct((T * BP, H2), jnp.float32),
        in_specs=[pl.BlockSpec(memory_space=pltpu.MemorySpace.VMEM)] * 7,
        out_specs=pl.BlockSpec(memory_space=pltpu.MemorySpace.VMEM),
        cost_estimate=pl.CostEstimate(flops=flops,
                                      transcendentals=transcendentals,
                                      bytes_accessed=nbytes),
    )(x2d, wih1, whh1, b1, wih2, whh2, b2)

    # time-major padded slab -> batch-first (B, seq_len, H2)
    out = out.reshape(T, BP, H2)[:, :B, :]
    out = jnp.transpose(out, (1, 0, 2))
    return out.reshape(B, seq_len, H2)  # matches the module's final reshape


# ------------------------- deterministic param init --------------------------
def init_lstm_params(key, input_size, hidden_size):
    # PyTorch nn.LSTM init: U(-1/sqrt(H), 1/sqrt(H)) for all weights/biases.
    k = 1.0 / (hidden_size ** 0.5)
    k_wih, k_whh, k_bih, k_bhh = jax.random.split(key, 4)
    return {
        "w_ih": jax.random.uniform(k_wih, (4 * hidden_size, input_size),
                                   jnp.float32, -k, k),
        "w_hh": jax.random.uniform(k_whh, (4 * hidden_size, hidden_size),
                                   jnp.float32, -k, k),
        "b_ih": jax.random.uniform(k_bih, (4 * hidden_size,), jnp.float32, -k, k),
        "b_hh": jax.random.uniform(k_bhh, (4 * hidden_size,), jnp.float32, -k, k),
    }


# ------------------------------ pure-JAX reference ---------------------------
def _lstm_layer_ref(x, p):
    B, T, _ = x.shape
    H = p["w_hh"].shape[1]
    b = p["b_ih"] + p["b_hh"]

    def step(carry, x_t):
        h, c = carry
        gates = x_t @ p["w_ih"].T + h @ p["w_hh"].T + b
        i_g = jax.nn.sigmoid(gates[:, 0 * H:1 * H])
        f_g = jax.nn.sigmoid(gates[:, 1 * H:2 * H])
        g_g = jnp.tanh(gates[:, 2 * H:3 * H])
        o_g = jax.nn.sigmoid(gates[:, 3 * H:4 * H])
        c_new = f_g * c + i_g * g_g
        h_new = o_g * jnp.tanh(c_new)
        return (h_new, c_new), h_new

    init = (jnp.zeros((B, H), jnp.float32), jnp.zeros((B, H), jnp.float32))
    _, hs = lax.scan(step, init, jnp.swapaxes(x, 0, 1))
    return jnp.swapaxes(hs, 0, 1)


def decoder_forward_ref(x, decoder_params, seq_len):
    batch_size = x.shape[0]
    x = jnp.tile(x, (1, seq_len, 1))
    hidden_size = None
    for p in decoder_params:
        x = _lstm_layer_ref(x, p)
        hidden_size = p["w_hh"].shape[1]
    return x.reshape((batch_size, seq_len, hidden_size))


# ----------------------------------- main ------------------------------------
if __name__ == "__main__":
    B, LATENT, SEQ_LEN, H1, H2 = 2, 8, 8, 32, 16

    key = jax.random.PRNGKey(0)
    k_x, k_l1, k_l2 = jax.random.split(key, 3)

    # latent code from the variational encoder: (B, 1, latent_dim)
    x = jax.random.normal(k_x, (B, 1, LATENT), jnp.float32)

    decoder_params = [
        init_lstm_params(k_l1, LATENT, H1),  # nn.LSTM(latent, H1, batch_first=True)
        init_lstm_params(k_l2, H1, H2),      # nn.LSTM(H1, H2, batch_first=True)
    ]

    out = lstm_variational_decoder_forward(x, decoder_params, seq_len=SEQ_LEN)
    out = jax.block_until_ready(out)

    ref = decoder_forward_ref(x, decoder_params, SEQ_LEN)
    assert out.shape == (B, SEQ_LEN, H2), out.shape
    assert jnp.allclose(out, ref, atol=1e-4, rtol=1e-4), "mismatch vs JAX reference"

    print("KERNEL_OK")
</pallas_src>

<mosaic_0001>
module attributes {stable_mosaic.version = 11 : i64} {
  func.func @_fused_decoder_kernel(%arg0: memref<8x8xf32, #tpu.memory_space<vmem>>, %arg1: memref<8x128xf32, #tpu.memory_space<vmem>>, %arg2: memref<32x128xf32, #tpu.memory_space<vmem>>, %arg3: memref<1x128xf32, #tpu.memory_space<vmem>>, %arg4: memref<32x64xf32, #tpu.memory_space<vmem>>, %arg5: memref<16x64xf32, #tpu.memory_space<vmem>>, %arg6: memref<1x64xf32, #tpu.memory_space<vmem>>, %arg7: memref<64x16xf32, #tpu.memory_space<vmem>>) attributes {dimension_semantics = [], scalar_prefetch = 0 : i64, scratch_operands = 0 : i64, tpu.core_type = #tpu.core_type<tc>} {
    %c0 = arith.constant 0 : index
    %c0_0 = arith.constant 0 : index
    %0 = vector.load %arg2[%c0, %c0_0] : memref<32x128xf32, #tpu.memory_space<vmem>>, vector<32x128xf32>
    %c0_1 = arith.constant 0 : index
    %c0_2 = arith.constant 0 : index
    %1 = vector.load %arg4[%c0_1, %c0_2] : memref<32x64xf32, #tpu.memory_space<vmem>>, vector<32x64xf32>
    %c0_3 = arith.constant 0 : index
    %c0_4 = arith.constant 0 : index
    %2 = vector.load %arg5[%c0_3, %c0_4] : memref<16x64xf32, #tpu.memory_space<vmem>>, vector<16x64xf32>
    %c0_5 = arith.constant 0 : index
    %c0_6 = arith.constant 0 : index
    %3 = vector.load %arg6[%c0_5, %c0_6] : memref<1x64xf32, #tpu.memory_space<vmem>>, vector<1x64xf32>
    %c0_7 = arith.constant 0 : index
    %c0_8 = arith.constant 0 : index
    %4 = vector.load %arg0[%c0_7, %c0_8] : memref<8x8xf32, #tpu.memory_space<vmem>>, vector<8x8xf32>
    %c0_9 = arith.constant 0 : index
    %c0_10 = arith.constant 0 : index
    %5 = vector.load %arg1[%c0_9, %c0_10] : memref<8x128xf32, #tpu.memory_space<vmem>>, vector<8x128xf32>
    %cst = arith.constant dense<0.000000e+00> : vector<8x128xf32>
    %6 = tpu.matmul %4, %5, %cst {dimension_numbers = #tpu.dot_dimension_numbers<[1], [0], [0], [1], [0, 0, 1, 1], [], []>} : vector<8x8xf32>, vector<8x128xf32>, vector<8x128xf32> -> vector<8x128xf32>
    %c0_11 = arith.constant 0 : index
    %c0_12 = arith.constant 0 : index
    %7 = vector.load %arg3[%c0_11, %c0_12] : memref<1x128xf32, #tpu.memory_space<vmem>>, vector<1x128xf32>
    %8 = vector.broadcast %7 : vector<1x128xf32> to vector<8x128xf32>
    %9 = arith.addf %6, %8 : vector<8x128xf32>
    %cst_13 = arith.constant 0.000000e+00 : f32
    %10 = vector.broadcast %cst_13 : f32 to vector<8x32xf32>
    %cst_14 = arith.constant 0.000000e+00 : f32
    %11 = vector.broadcast %cst_14 : f32 to vector<8x32xf32>
    %cst_15 = arith.constant 0.000000e+00 : f32
    %12 = vector.broadcast %cst_15 : f32 to vector<8x16xf32>
    %cst_16 = arith.constant 0.000000e+00 : f32
    %13 = vector.broadcast %cst_16 : f32 to vector<8x16xf32>
    %cst_17 = arith.constant dense<0.000000e+00> : vector<8x128xf32>
    %14 = tpu.matmul %10, %0, %cst_17 {dimension_numbers = #tpu.dot_dimension_numbers<[1], [0], [0], [1], [0, 0, 1, 1], [], []>} : vector<8x32xf32>, vector<32x128xf32>, vector<8x128xf32> -> vector<8x128xf32>
    %15 = arith.addf %9, %14 : vector<8x128xf32>
    %cst_18 = arith.constant 5.000000e-01 : f32
    %16 = vector.broadcast %cst_18 : f32 to vector<8x128xf32>
    %17 = arith.mulf %16, %15 : vector<8x128xf32>
    %18 = math.tanh %17 : vector<8x128xf32>
    %cst_19 = arith.constant 5.000000e-01 : f32
    %19 = vector.broadcast %cst_19 : f32 to vector<8x128xf32>
    %20 = arith.mulf %19, %18 : vector<8x128xf32>
    %cst_20 = arith.constant 5.000000e-01 : f32
    %21 = vector.broadcast %cst_20 : f32 to vector<8x128xf32>
    %22 = arith.addf %20, %21 : vector<8x128xf32>
    %23 = vector.extract_strided_slice %22 {offsets = [0, 0], sizes = [8, 32], strides = [1, 1]} : vector<8x128xf32> to vector<8x32xf32>
    %24 = vector.extract_strided_slice %22 {offsets = [0, 32], sizes = [8, 32], strides = [1, 1]} : vector<8x128xf32> to vector<8x32xf32>
    %25 = vector.extract_strided_slice %22 {offsets = [0, 96], sizes = [8, 32], strides = [1, 1]} : vector<8x128xf32> to vector<8x32xf32>
    %26 = vector.extract_strided_slice %15 {offsets = [0, 64], sizes = [8, 32], strides = [1, 1]} : vector<8x128xf32> to vector<8x32xf32>
    %27 = math.tanh %26 : vector<8x32xf32>
    %28 = arith.mulf %24, %11 : vector<8x32xf32>
    %29 = arith.mulf %23, %27 : vector<8x32xf32>
    %30 = arith.addf %28, %29 : vector<8x32xf32>
    %31 = math.tanh %30 : vector<8x32xf32>
    %32 = arith.mulf %25, %31 : vector<8x32xf32>
    %cst_21 = arith.constant dense<0.000000e+00> : vector<8x128xf32>
    %33 = tpu.matmul %32, %0, %cst_21 {dimension_numbers = #tpu.dot_dimension_numbers<[1], [0], [0], [1], [0, 0, 1, 1], [], []>} : vector<8x32xf32>, vector<32x128xf32>, vector<8x128xf32> -> vector<8x128xf32>
    %34 = arith.addf %9, %33 : vector<8x128xf32>
    %cst_22 = arith.constant 5.000000e-01 : f32
    %35 = vector.broadcast %cst_22 : f32 to vector<8x128xf32>
    %36 = arith.mulf %35, %34 : vector<8x128xf32>
    %37 = math.tanh %36 : vector<8x128xf32>
    %cst_23 = arith.constant 5.000000e-01 : f32
    %38 = vector.broadcast %cst_23 : f32 to vector<8x128xf32>
    %39 = arith.mulf %38, %37 : vector<8x128xf32>
    %cst_24 = arith.constant 5.000000e-01 : f32
    %40 = vector.broadcast %cst_24 : f32 to vector<8x128xf32>
    %41 = arith.addf %39, %40 : vector<8x128xf32>
    %42 = vector.extract_strided_slice %41 {offsets = [0, 0], sizes = [8, 32], strides = [1, 1]} : vector<8x128xf32> to vector<8x32xf32>
    %43 = vector.extract_strided_slice %41 {offsets = [0, 32], sizes = [8, 32], strides = [1, 1]} : vector<8x128xf32> to vector<8x32xf32>
    %44 = vector.extract_strided_slice %41 {offsets = [0, 96], sizes = [8, 32], strides = [1, 1]} : vector<8x128xf32> to vector<8x32xf32>
    %45 = vector.extract_strided_slice %34 {offsets = [0, 64], sizes = [8, 32], strides = [1, 1]} : vector<8x128xf32> to vector<8x32xf32>
    %46 = math.tanh %45 : vector<8x32xf32>
    %47 = arith.mulf %43, %30 : vector<8x32xf32>
    %48 = arith.mulf %42, %46 : vector<8x32xf32>
    %49 = arith.addf %47, %48 : vector<8x32xf32>
    %50 = math.tanh %49 : vector<8x32xf32>
    %51 = arith.mulf %44, %50 : vector<8x32xf32>
    %cst_25 = arith.constant dense<0.000000e+00> : vector<8x64xf32>
    %52 = tpu.matmul %32, %1, %cst_25 {dimension_numbers = #tpu.dot_dimension_numbers<[1], [0], [0], [1], [0, 0, 1, 1], [], []>} : vector<8x32xf32>, vector<32x64xf32>, vector<8x64xf32> -> vector<8x64xf32>
    %53 = vector.broadcast %3 : vector<1x64xf32> to vector<8x64xf32>
    %54 = arith.addf %52, %53 : vector<8x64xf32>
    %cst_26 = arith.constant dense<0.000000e+00> : vector<8x64xf32>
    %55 = tpu.matmul %12, %2, %cst_26 {dimension_numbers = #tpu.dot_dimension_numbers<[1], [0], [0], [1], [0, 0, 1, 1], [], []>} : vector<8x16xf32>, vector<16x64xf32>, vector<8x64xf32> -> vector<8x64xf32>
    %56 = arith.addf %54, %55 : vector<8x64xf32>
    %cst_27 = arith.constant 5.000000e-01 : f32
    %57 = vector.broadcast %cst_27 : f32 to vector<8x64xf32>
    %58 = arith.mulf %57, %56 : vector<8x64xf32>
    %59 = math.tanh %58 : vector<8x64xf32>
    %cst_28 = arith.constant 5.000000e-01 : f32
    %60 = vector.broadcast %cst_28 : f32 to vector<8x64xf32>
    %61 = arith.mulf %60, %59 : vector<8x64xf32>
    %cst_29 = arith.constant 5.000000e-01 : f32
    %62 = vector.broadcast %cst_29 : f32 to vector<8x64xf32>
    %63 = arith.addf %61, %62 : vector<8x64xf32>
    %64 = vector.extract_strided_slice %63 {offsets = [0, 0], sizes = [8, 16], strides = [1, 1]} : vector<8x64xf32> to vector<8x16xf32>
    %65 = vector.extract_strided_slice %63 {offsets = [0, 16], sizes = [8, 16], strides = [1, 1]} : vector<8x64xf32> to vector<8x16xf32>
    %66 = vector.extract_strided_slice %63 {offsets = [0, 48], sizes = [8, 16], strides = [1, 1]} : vector<8x64xf32> to vector<8x16xf32>
    %67 = vector.extract_strided_slice %56 {offsets = [0, 32], sizes = [8, 16], strides = [1, 1]} : vector<8x64xf32> to vector<8x16xf32>
    %68 = math.tanh %67 : vector<8x16xf32>
    %69 = arith.mulf %65, %13 : vector<8x16xf32>
    %70 = arith.mulf %64, %68 : vector<8x16xf32>
    %71 = arith.addf %69, %70 : vector<8x16xf32>
    %72 = math.tanh %71 : vector<8x16xf32>
    %73 = arith.mulf %66, %72 : vector<8x16xf32>
    %c0_30 = arith.constant 0 : index
    %c0_31 = arith.constant 0 : index
    %74 = vector.load %arg7[%c0_30, %c0_31] : memref<64x16xf32, #tpu.memory_space<vmem>>, vector<8x16xf32>
    tpu.vector_store %arg7[%c0_30, %c0_31], %73 {strides = array<i32>} : memref<64x16xf32, #tpu.memory_space<vmem>>, vector<8x16xf32>,
    %cst_32 = arith.constant dense<0.000000e+00> : vector<8x128xf32>
    %75 = tpu.matmul %51, %0, %cst_32 {dimension_numbers = #tpu.dot_dimension_numbers<[1], [0], [0], [1], [0, 0, 1, 1], [], []>} : vector<8x32xf32>, vector<32x128xf32>, vector<8x128xf32> -> vector<8x128xf32>
    %76 = arith.addf %9, %75 : vector<8x128xf32>
    %cst_33 = arith.constant 5.000000e-01 : f32
    %77 = vector.broadcast %cst_33 : f32 to vector<8x128xf32>
    %78 = arith.mulf %77, %76 : vector<8x128xf32>
    %79 = math.tanh %78 : vector<8x128xf32>
    %cst_34 = arith.constant 5.000000e-01 : f32
    %80 = vector.broadcast %cst_34 : f32 to vector<8x128xf32>
    %81 = arith.mulf %80, %79 : vector<8x128xf32>
    %cst_35 = arith.constant 5.000000e-01 : f32
    %82 = vector.broadcast %cst_35 : f32 to vector<8x128xf32>
    %83 = arith.addf %81, %82 : vector<8x128xf32>
    %84 = vector.extract_strided_slice %83 {offsets = [0, 0], sizes = [8, 32], strides = [1, 1]} : vector<8x128xf32> to vector<8x32xf32>
    %85 = vector.extract_strided_slice %83 {offsets = [0, 32], sizes = [8, 32], strides = [1, 1]} : vector<8x128xf32> to vector<8x32xf32>
    %86 = vector.extract_strided_slice %83 {offsets = [0, 96], sizes = [8, 32], strides = [1, 1]} : vector<8x128xf32> to vector<8x32xf32>
    %87 = vector.extract_strided_slice %76 {offsets = [0, 64], sizes = [8, 32], strides = [1, 1]} : vector<8x128xf32> to vector<8x32xf32>
    %88 = math.tanh %87 : vector<8x32xf32>
    %89 = arith.mulf %85, %49 : vector<8x32xf32>
    %90 = arith.mulf %84, %88 : vector<8x32xf32>
    %91 = arith.addf %89, %90 : vector<8x32xf32>
    %92 = math.tanh %91 : vector<8x32xf32>
    %93 = arith.mulf %86, %92 : vector<8x32xf32>
    %cst_36 = arith.constant dense<0.000000e+00> : vector<8x64xf32>
    %94 = tpu.matmul %51, %1, %cst_36 {dimension_numbers = #tpu.dot_dimension_numbers<[1], [0], [0], [1], [0, 0, 1, 1], [], []>} : vector<8x32xf32>, vector<32x64xf32>, vector<8x64xf32> -> vector<8x64xf32>
    %95 = vector.broadcast %3 : vector<1x64xf32> to vector<8x64xf32>
    %96 = arith.addf %94, %95 : vector<8x64xf32>
    %cst_37 = arith.constant dense<0.000000e+00> : vector<8x64xf32>
    %97 = tpu.matmul %73, %2, %cst_37 {dimension_numbers = #tpu.dot_dimension_numbers<[1], [0], [0], [1], [0, 0, 1, 1], [], []>} : vector<8x16xf32>, vector<16x64xf32>, vector<8x64xf32> -> vector<8x64xf32>
    %98 = arith.addf %96, %97 : vector<8x64xf32>
    %cst_38 = arith.constant 5.000000e-01 : f32
    %99 = vector.broadcast %cst_38 : f32 to vector<8x64xf32>
    %100 = arith.mulf %99, %98 : vector<8x64xf32>
    %101 = math.tanh %100 : vector<8x64xf32>
    %cst_39 = arith.constant 5.000000e-01 : f32
    %102 = vector.broadcast %cst_39 : f32 to vector<8x64xf32>
    %103 = arith.mulf %102, %101 : vector<8x64xf32>
    %cst_40 = arith.constant 5.000000e-01 : f32
    %104 = vector.broadcast %cst_40 : f32 to vector<8x64xf32>
    %105 = arith.addf %103, %104 : vector<8x64xf32>
    %106 = vector.extract_strided_slice %105 {offsets = [0, 0], sizes = [8, 16], strides = [1, 1]} : vector<8x64xf32> to vector<8x16xf32>
    %107 = vector.extract_strided_slice %105 {offsets = [0, 16], sizes = [8, 16], strides = [1, 1]} : vector<8x64xf32> to vector<8x16xf32>
    %108 = vector.extract_strided_slice %105 {offsets = [0, 48], sizes = [8, 16], strides = [1, 1]} : vector<8x64xf32> to vector<8x16xf32>
    %109 = vector.extract_strided_slice %98 {offsets = [0, 32], sizes = [8, 16], strides = [1, 1]} : vector<8x64xf32> to vector<8x16xf32>
    %110 = math.tanh %109 : vector<8x16xf32>
    %111 = arith.mulf %107, %71 : vector<8x16xf32>
    %112 = arith.mulf %106, %110 : vector<8x16xf32>
    %113 = arith.addf %111, %112 : vector<8x16xf32>
    %114 = math.tanh %113 : vector<8x16xf32>
    %115 = arith.mulf %108, %114 : vector<8x16xf32>
    %c8 = arith.constant 8 : index
    %c0_41 = arith.constant 0 : index
    %116 = vector.load %arg7[%c8, %c0_41] : memref<64x16xf32, #tpu.memory_space<vmem>>, vector<8x16xf32>
    tpu.vector_store %arg7[%c8, %c0_41], %115 {strides = array<i32>} : memref<64x16xf32, #tpu.memory_space<vmem>>, vector<8x16xf32>,
    %cst_42 = arith.constant dense<0.000000e+00> : vector<8x128xf32>
    %117 = tpu.matmul %93, %0, %cst_42 {dimension_numbers = #tpu.dot_dimension_numbers<[1], [0], [0], [1], [0, 0, 1, 1], [], []>} : vector<8x32xf32>, vector<32x128xf32>, vector<8x128xf32> -> vector<8x128xf32>
    %118 = arith.addf %9, %117 : vector<8x128xf32>
    %cst_43 = arith.constant 5.000000e-01 : f32
    %119 = vector.broadcast %cst_43 : f32 to vector<8x128xf32>
    %120 = arith.mulf %119, %118 : vector<8x128xf32>
    %121 = math.tanh %120 : vector<8x128xf32>
    %cst_44 = arith.constant 5.000000e-01 : f32
    %122 = vector.broadcast %cst_44 : f32 to vector<8x128xf32>
    %123 = arith.mulf %122, %121 : vector<8x128xf32>
    %cst_45 = arith.constant 5.000000e-01 : f32
    %124 = vector.broadcast %cst_45 : f32 to vector<8x128xf32>
    %125 = arith.addf %123, %124 : vector<8x128xf32>
    %126 = vector.extract_strided_slice %125 {offsets = [0, 0], sizes = [8, 32], strides = [1, 1]} : vector<8x128xf32> to vector<8x32xf32>
    %127 = vector.extract_strided_slice %125 {offsets = [0, 32], sizes = [8, 32], strides = [1, 1]} : vector<8x128xf32> to vector<8x32xf32>
    %128 = vector.extract_strided_slice %125 {offsets = [0, 96], sizes = [8, 32], strides = [1, 1]} : vector<8x128xf32> to vector<8x32xf32>
    %129 = vector.extract_strided_slice %118 {offsets = [0, 64], sizes = [8, 32], strides = [1, 1]} : vector<8x128xf32> to vector<8x32xf32>
    %130 = math.tanh %129 : vector<8x32xf32>
    %131 = arith.mulf %127, %91 : vector<8x32xf32>
    %132 = arith.mulf %126, %130 : vector<8x32xf32>
    %133 = arith.addf %131, %132 : vector<8x32xf32>
    %134 = math.tanh %133 : vector<8x32xf32>
    %135 = arith.mulf %128, %134 : vector<8x32xf32>
    %cst_46 = arith.constant dense<0.000000e+00> : vector<8x64xf32>
    %136 = tpu.matmul %93, %1, %cst_46 {dimension_numbers = #tpu.dot_dimension_numbers<[1], [0], [0], [1], [0, 0, 1, 1], [], []>} : vector<8x32xf32>, vector<32x64xf32>, vector<8x64xf32> -> vector<8x64xf32>
    %137 = vector.broadcast %3 : vector<1x64xf32> to vector<8x64xf32>
    %138 = arith.addf %136, %137 : vector<8x64xf32>
    %cst_47 = arith.constant dense<0.000000e+00> : vector<8x64xf32>
    %139 = tpu.matmul %115, %2, %cst_47 {dimension_numbers = #tpu.dot_dimension_numbers<[1], [0], [0], [1], [0, 0, 1, 1], [], []>} : vector<8x16xf32>, vector<16x64xf32>, vector<8x64xf32> -> vector<8x64xf32>
    %140 = arith.addf %138, %139 : vector<8x64xf32>
    %cst_48 = arith.constant 5.000000e-01 : f32
    %141 = vector.broadcast %cst_48 : f32 to vector<8x64xf32>
    %142 = arith.mulf %141, %140 : vector<8x64xf32>
    %143 = math.tanh %142 : vector<8x64xf32>
    %cst_49 = arith.constant 5.000000e-01 : f32
    %144 = vector.broadcast %cst_49 : f32 to vector<8x64xf32>
    %145 = arith.mulf %144, %143 : vector<8x64xf32>
    %cst_50 = arith.constant 5.000000e-01 : f32
    %146 = vector.broadcast %cst_50 : f32 to vector<8x64xf32>
    %147 = arith.addf %145, %146 : vector<8x64xf32>
    %148 = vector.extract_strided_slice %147 {offsets = [0, 0], sizes = [8, 16], strides = [1, 1]} : vector<8x64xf32> to vector<8x16xf32>
    %149 = vector.extract_strided_slice %147 {offsets = [0, 16], sizes = [8, 16], strides = [1, 1]} : vector<8x64xf32> to vector<8x16xf32>
    %150 = vector.extract_strided_slice %147 {offsets = [0, 48], sizes = [8, 16], strides = [1, 1]} : vector<8x64xf32> to vector<8x16xf32>
    %151 = vector.extract_strided_slice %140 {offsets = [0, 32], sizes = [8, 16], strides = [1, 1]} : vector<8x64xf32> to vector<8x16xf32>
    %152 = math.tanh %151 : vector<8x16xf32>
    %153 = arith.mulf %149, %113 : vector<8x16xf32>
    %154 = arith.mulf %148, %152 : vector<8x16xf32>
    %155 = arith.addf %153, %154 : vector<8x16xf32>
    %156 = math.tanh %155 : vector<8x16xf32>
    %157 = arith.mulf %150, %156 : vector<8x16xf32>
    %c16 = arith.constant 16 : index
    %c0_51 = arith.constant 0 : index
    %158 = vector.load %arg7[%c16, %c0_51] : memref<64x16xf32, #tpu.memory_space<vmem>>, vector<8x16xf32>
    tpu.vector_store %arg7[%c16, %c0_51], %157 {strides = array<i32>} : memref<64x16xf32, #tpu.memory_space<vmem>>, vector<8x16xf32>,
    %cst_52 = arith.constant dense<0.000000e+00> : vector<8x128xf32>
    %159 = tpu.matmul %135, %0, %cst_52 {dimension_numbers = #tpu.dot_dimension_numbers<[1], [0], [0], [1], [0, 0, 1, 1], [], []>} : vector<8x32xf32>, vector<32x128xf32>, vector<8x128xf32> -> vector<8x128xf32>
    %160 = arith.addf %9, %159 : vector<8x128xf32>
    %cst_53 = arith.constant 5.000000e-01 : f32
    %161 = vector.broadcast %cst_53 : f32 to vector<8x128xf32>
    %162 = arith.mulf %161, %160 : vector<8x128xf32>
    %163 = math.tanh %162 : vector<8x128xf32>
    %cst_54 = arith.constant 5.000000e-01 : f32
    %164 = vector.broadcast %cst_54 : f32 to vector<8x128xf32>
    %165 = arith.mulf %164, %163 : vector<8x128xf32>
    %cst_55 = arith.constant 5.000000e-01 : f32
    %166 = vector.broadcast %cst_55 : f32 to vector<8x128xf32>
    %167 = arith.addf %165, %166 : vector<8x128xf32>
    %168 = vector.extract_strided_slice %167 {offsets = [0, 0], sizes = [8, 32], strides = [1, 1]} : vector<8x128xf32> to vector<8x32xf32>
    %169 = vector.extract_strided_slice %167 {offsets = [0, 32], sizes = [8, 32], strides = [1, 1]} : vector<8x128xf32> to vector<8x32xf32>
    %170 = vector.extract_strided_slice %167 {offsets = [0, 96], sizes = [8, 32], strides = [1, 1]} : vector<8x128xf32> to vector<8x32xf32>
    %171 = vector.extract_strided_slice %160 {offsets = [0, 64], sizes = [8, 32], strides = [1, 1]} : vector<8x128xf32> to vector<8x32xf32>
    %172 = math.tanh %171 : vector<8x32xf32>
    %173 = arith.mulf %169, %133 : vector<8x32xf32>
    %174 = arith.mulf %168, %172 : vector<8x32xf32>
    %175 = arith.addf %173, %174 : vector<8x32xf32>
    %176 = math.tanh %175 : vector<8x32xf32>
    %177 = arith.mulf %170, %176 : vector<8x32xf32>
    %cst_56 = arith.constant dense<0.000000e+00> : vector<8x64xf32>
    %178 = tpu.matmul %135, %1, %cst_56 {dimension_numbers = #tpu.dot_dimension_numbers<[1], [0], [0], [1], [0, 0, 1, 1], [], []>} : vector<8x32xf32>, vector<32x64xf32>, vector<8x64xf32> -> vector<8x64xf32>
    %179 = vector.broadcast %3 : vector<1x64xf32> to vector<8x64xf32>
    %180 = arith.addf %178, %179 : vector<8x64xf32>
    %cst_57 = arith.constant dense<0.000000e+00> : vector<8x64xf32>
    %181 = tpu.matmul %157, %2, %cst_57 {dimension_numbers = #tpu.dot_dimension_numbers<[1], [0], [0], [1], [0, 0, 1, 1], [], []>} : vector<8x16xf32>, vector<16x64xf32>, vector<8x64xf32> -> vector<8x64xf32>
    %182 = arith.addf %180, %181 : vector<8x64xf32>
    %cst_58 = arith.constant 5.000000e-01 : f32
    %183 = vector.broadcast %cst_58 : f32 to vector<8x64xf32>
    %184 = arith.mulf %183, %182 : vector<8x64xf32>
    %185 = math.tanh %184 : vector<8x64xf32>
    %cst_59 = arith.constant 5.000000e-01 : f32
    %186 = vector.broadcast %cst_59 : f32 to vector<8x64xf32>
    %187 = arith.mulf %186, %185 : vector<8x64xf32>
    %cst_60 = arith.constant 5.000000e-01 : f32
    %188 = vector.broadcast %cst_60 : f32 to vector<8x64xf32>
    %189 = arith.addf %187, %188 : vector<8x64xf32>
    %190 = vector.extract_strided_slice %189 {offsets = [0, 0], sizes = [8, 16], strides = [1, 1]} : vector<8x64xf32> to vector<8x16xf32>
    %191 = vector.extract_strided_slice %189 {offsets = [0, 16], sizes = [8, 16], strides = [1, 1]} : vector<8x64xf32> to vector<8x16xf32>
    %192 = vector.extract_strided_slice %189 {offsets = [0, 48], sizes = [8, 16], strides = [1, 1]} : vector<8x64xf32> to vector<8x16xf32>
    %193 = vector.extract_strided_slice %182 {offsets = [0, 32], sizes = [8, 16], strides = [1, 1]} : vector<8x64xf32> to vector<8x16xf32>
    %194 = math.tanh %193 : vector<8x16xf32>
    %195 = arith.mulf %191, %155 : vector<8x16xf32>
    %196 = arith.mulf %190, %194 : vector<8x16xf32>
    %197 = arith.addf %195, %196 : vector<8x16xf32>
    %198 = math.tanh %197 : vector<8x16xf32>
    %199 = arith.mulf %192, %198 : vector<8x16xf32>
    %c24 = arith.constant 24 : index
    %c0_61 = arith.constant 0 : index
    %200 = vector.load %arg7[%c24, %c0_61] : memref<64x16xf32, #tpu.memory_space<vmem>>, vector<8x16xf32>
    tpu.vector_store %arg7[%c24, %c0_61], %199 {strides = array<i32>} : memref<64x16xf32, #tpu.memory_space<vmem>>, vector<8x16xf32>,
    %cst_62 = arith.constant dense<0.000000e+00> : vector<8x128xf32>
    %201 = tpu.matmul %177, %0, %cst_62 {dimension_numbers = #tpu.dot_dimension_numbers<[1], [0], [0], [1], [0, 0, 1, 1], [], []>} : vector<8x32xf32>, vector<32x128xf32>, vector<8x128xf32> -> vector<8x128xf32>
    %202 = arith.addf %9, %201 : vector<8x128xf32>
    %cst_63 = arith.constant 5.000000e-01 : f32
    %203 = vector.broadcast %cst_63 : f32 to vector<8x128xf32>
    %204 = arith.mulf %203, %202 : vector<8x128xf32>
    %205 = math.tanh %204 : vector<8x128xf32>
    %cst_64 = arith.constant 5.000000e-01 : f32
    %206 = vector.broadcast %cst_64 : f32 to vector<8x128xf32>
    %207 = arith.mulf %206, %205 : vector<8x128xf32>
    %cst_65 = arith.constant 5.000000e-01 : f32
    %208 = vector.broadcast %cst_65 : f32 to vector<8x128xf32>
    %209 = arith.addf %207, %208 : vector<8x128xf32>
    %210 = vector.extract_strided_slice %209 {offsets = [0, 0], sizes = [8, 32], strides = [1, 1]} : vector<8x128xf32> to vector<8x32xf32>
    %211 = vector.extract_strided_slice %209 {offsets = [0, 32], sizes = [8, 32], strides = [1, 1]} : vector<8x128xf32> to vector<8x32xf32>
    %212 = vector.extract_strided_slice %209 {offsets = [0, 96], sizes = [8, 32], strides = [1, 1]} : vector<8x128xf32> to vector<8x32xf32>
    %213 = vector.extract_strided_slice %202 {offsets = [0, 64], sizes = [8, 32], strides = [1, 1]} : vector<8x128xf32> to vector<8x32xf32>
    %214 = math.tanh %213 : vector<8x32xf32>
    %215 = arith.mulf %211, %175 : vector<8x32xf32>
    %216 = arith.mulf %210, %214 : vector<8x32xf32>
    %217 = arith.addf %215, %216 : vector<8x32xf32>
    %218 = math.tanh %217 : vector<8x32xf32>
    %219 = arith.mulf %212, %218 : vector<8x32xf32>
    %cst_66 = arith.constant dense<0.000000e+00> : vector<8x64xf32>
    %220 = tpu.matmul %177, %1, %cst_66 {dimension_numbers = #tpu.dot_dimension_numbers<[1], [0], [0], [1], [0, 0, 1, 1], [], []>} : vector<8x32xf32>, vector<32x64xf32>, vector<8x64xf32> -> vector<8x64xf32>
    %221 = vector.broadcast %3 : vector<1x64xf32> to vector<8x64xf32>
    %222 = arith.addf %220, %221 : vector<8x64xf32>
    %cst_67 = arith.constant dense<0.000000e+00> : vector<8x64xf32>
    %223 = tpu.matmul %199, %2, %cst_67 {dimension_numbers = #tpu.dot_dimension_numbers<[1], [0], [0], [1], [0, 0, 1, 1], [], []>} : vector<8x16xf32>, vector<16x64xf32>, vector<8x64xf32> -> vector<8x64xf32>
    %224 = arith.addf %222, %223 : vector<8x64xf32>
    %cst_68 = arith.constant 5.000000e-01 : f32
    %225 = vector.broadcast %cst_68 : f32 to vector<8x64xf32>
    %226 = arith.mulf %225, %224 : vector<8x64xf32>
    %227 = math.tanh %226 : vector<8x64xf32>
    %cst_69 = arith.constant 5.000000e-01 : f32
    %228 = vector.broadcast %cst_69 : f32 to vector<8x64xf32>
    %229 = arith.mulf %228, %227 : vector<8x64xf32>
    %cst_70 = arith.constant 5.000000e-01 : f32
    %230 = vector.broadcast %cst_70 : f32 to vector<8x64xf32>
    %231 = arith.addf %229, %230 : vector<8x64xf32>
    %232 = vector.extract_strided_slice %231 {offsets = [0, 0], sizes = [8, 16], strides = [1, 1]} : vector<8x64xf32> to vector<8x16xf32>
    %233 = vector.extract_strided_slice %231 {offsets = [0, 16], sizes = [8, 16], strides = [1, 1]} : vector<8x64xf32> to vector<8x16xf32>
    %234 = vector.extract_strided_slice %231 {offsets = [0, 48], sizes = [8, 16], strides = [1, 1]} : vector<8x64xf32> to vector<8x16xf32>
    %235 = vector.extract_strided_slice %224 {offsets = [0, 32], sizes = [8, 16], strides = [1, 1]} : vector<8x64xf32> to vector<8x16xf32>
    %236 = math.tanh %235 : vector<8x16xf32>
    %237 = arith.mulf %233, %197 : vector<8x16xf32>
    %238 = arith.mulf %232, %236 : vector<8x16xf32>
    %239 = arith.addf %237, %238 : vector<8x16xf32>
    %240 = math.tanh %239 : vector<8x16xf32>
    %241 = arith.mulf %234, %240 : vector<8x16xf32>
    %c32 = arith.constant 32 : index
    %c0_71 = arith.constant 0 : index
    %242 = vector.load %arg7[%c32, %c0_71] : memref<64x16xf32, #tpu.memory_space<vmem>>, vector<8x16xf32>
    tpu.vector_store %arg7[%c32, %c0_71], %241 {strides = array<i32>} : memref<64x16xf32, #tpu.memory_space<vmem>>, vector<8x16xf32>,
    %cst_72 = arith.constant dense<0.000000e+00> : vector<8x128xf32>
    %243 = tpu.matmul %219, %0, %cst_72 {dimension_numbers = #tpu.dot_dimension_numbers<[1], [0], [0], [1], [0, 0, 1, 1], [], []>} : vector<8x32xf32>, vector<32x128xf32>, vector<8x128xf32> -> vector<8x128xf32>
    %244 = arith.addf %9, %243 : vector<8x128xf32>
    %cst_73 = arith.constant 5.000000e-01 : f32
    %245 = vector.broadcast %cst_73 : f32 to vector<8x128xf32>
    %246 = arith.mulf %245, %244 : vector<8x128xf32>
    %247 = math.tanh %246 : vector<8x128xf32>
    %cst_74 = arith.constant 5.000000e-01 : f32
    %248 = vector.broadcast %cst_74 : f32 to vector<8x128xf32>
    %249 = arith.mulf %248, %247 : vector<8x128xf32>
    %cst_75 = arith.constant 5.000000e-01 : f32
    %250 = vector.broadcast %cst_75 : f32 to vector<8x128xf32>
    %251 = arith.addf %249, %250 : vector<8x128xf32>
    %252 = vector.extract_strided_slice %251 {offsets = [0, 0], sizes = [8, 32], strides = [1, 1]} : vector<8x128xf32> to vector<8x32xf32>
    %253 = vector.extract_strided_slice %251 {offsets = [0, 32], sizes = [8, 32], strides = [1, 1]} : vector<8x128xf32> to vector<8x32xf32>
    %254 = vector.extract_strided_slice %251 {offsets = [0, 96], sizes = [8, 32], strides = [1, 1]} : vector<8x128xf32> to vector<8x32xf32>
    %255 = vector.extract_strided_slice %244 {offsets = [0, 64], sizes = [8, 32], strides = [1, 1]} : vector<8x128xf32> to vector<8x32xf32>
    %256 = math.tanh %255 : vector<8x32xf32>
    %257 = arith.mulf %253, %217 : vector<8x32xf32>
    %258 = arith.mulf %252, %256 : vector<8x32xf32>
    %259 = arith.addf %257, %258 : vector<8x32xf32>
    %260 = math.tanh %259 : vector<8x32xf32>
    %261 = arith.mulf %254, %260 : vector<8x32xf32>
    %cst_76 = arith.constant dense<0.000000e+00> : vector<8x64xf32>
    %262 = tpu.matmul %219, %1, %cst_76 {dimension_numbers = #tpu.dot_dimension_numbers<[1], [0], [0], [1], [0, 0, 1, 1], [], []>} : vector<8x32xf32>, vector<32x64xf32>, vector<8x64xf32> -> vector<8x64xf32>
    %263 = vector.broadcast %3 : vector<1x64xf32> to vector<8x64xf32>
    %264 = arith.addf %262, %263 : vector<8x64xf32>
    %cst_77 = arith.constant dense<0.000000e+00> : vector<8x64xf32>
    %265 = tpu.matmul %241, %2, %cst_77 {dimension_numbers = #tpu.dot_dimension_numbers<[1], [0], [0], [1], [0, 0, 1, 1], [], []>} : vector<8x16xf32>, vector<16x64xf32>, vector<8x64xf32> -> vector<8x64xf32>
    %266 = arith.addf %264, %265 : vector<8x64xf32>
    %cst_78 = arith.constant 5.000000e-01 : f32
    %267 = vector.broadcast %cst_78 : f32 to vector<8x64xf32>
    %268 = arith.mulf %267, %266 : vector<8x64xf32>
    %269 = math.tanh %268 : vector<8x64xf32>
    %cst_79 = arith.constant 5.000000e-01 : f32
    %270 = vector.broadcast %cst_79 : f32 to vector<8x64xf32>
    %271 = arith.mulf %270, %269 : vector<8x64xf32>
    %cst_80 = arith.constant 5.000000e-01 : f32
    %272 = vector.broadcast %cst_80 : f32 to vector<8x64xf32>
    %273 = arith.addf %271, %272 : vector<8x64xf32>
    %274 = vector.extract_strided_slice %273 {offsets = [0, 0], sizes = [8, 16], strides = [1, 1]} : vector<8x64xf32> to vector<8x16xf32>
    %275 = vector.extract_strided_slice %273 {offsets = [0, 16], sizes = [8, 16], strides = [1, 1]} : vector<8x64xf32> to vector<8x16xf32>
    %276 = vector.extract_strided_slice %273 {offsets = [0, 48], sizes = [8, 16], strides = [1, 1]} : vector<8x64xf32> to vector<8x16xf32>
    %277 = vector.extract_strided_slice %266 {offsets = [0, 32], sizes = [8, 16], strides = [1, 1]} : vector<8x64xf32> to vector<8x16xf32>
    %278 = math.tanh %277 : vector<8x16xf32>
    %279 = arith.mulf %275, %239 : vector<8x16xf32>
    %280 = arith.mulf %274, %278 : vector<8x16xf32>
    %281 = arith.addf %279, %280 : vector<8x16xf32>
    %282 = math.tanh %281 : vector<8x16xf32>
    %283 = arith.mulf %276, %282 : vector<8x16xf32>
    %c40 = arith.constant 40 : index
    %c0_81 = arith.constant 0 : index
    %284 = vector.load %arg7[%c40, %c0_81] : memref<64x16xf32, #tpu.memory_space<vmem>>, vector<8x16xf32>
    tpu.vector_store %arg7[%c40, %c0_81], %283 {strides = array<i32>} : memref<64x16xf32, #tpu.memory_space<vmem>>, vector<8x16xf32>,
    %cst_82 = arith.constant dense<0.000000e+00> : vector<8x128xf32>
    %285 = tpu.matmul %261, %0, %cst_82 {dimension_numbers = #tpu.dot_dimension_numbers<[1], [0], [0], [1], [0, 0, 1, 1], [], []>} : vector<8x32xf32>, vector<32x128xf32>, vector<8x128xf32> -> vector<8x128xf32>
    %286 = arith.addf %9, %285 : vector<8x128xf32>
    %cst_83 = arith.constant 5.000000e-01 : f32
    %287 = vector.broadcast %cst_83 : f32 to vector<8x128xf32>
    %288 = arith.mulf %287, %286 : vector<8x128xf32>
    %289 = math.tanh %288 : vector<8x128xf32>
    %cst_84 = arith.constant 5.000000e-01 : f32
    %290 = vector.broadcast %cst_84 : f32 to vector<8x128xf32>
    %291 = arith.mulf %290, %289 : vector<8x128xf32>
    %cst_85 = arith.constant 5.000000e-01 : f32
    %292 = vector.broadcast %cst_85 : f32 to vector<8x128xf32>
    %293 = arith.addf %291, %292 : vector<8x128xf32>
    %294 = vector.extract_strided_slice %293 {offsets = [0, 0], sizes = [8, 32], strides = [1, 1]} : vector<8x128xf32> to vector<8x32xf32>
    %295 = vector.extract_strided_slice %293 {offsets = [0, 32], sizes = [8, 32], strides = [1, 1]} : vector<8x128xf32> to vector<8x32xf32>
    %296 = vector.extract_strided_slice %293 {offsets = [0, 96], sizes = [8, 32], strides = [1, 1]} : vector<8x128xf32> to vector<8x32xf32>
    %297 = vector.extract_strided_slice %286 {offsets = [0, 64], sizes = [8, 32], strides = [1, 1]} : vector<8x128xf32> to vector<8x32xf32>
    %298 = math.tanh %297 : vector<8x32xf32>
    %299 = arith.mulf %295, %259 : vector<8x32xf32>
    %300 = arith.mulf %294, %298 : vector<8x32xf32>
    %301 = arith.addf %299, %300 : vector<8x32xf32>
    %302 = math.tanh %301 : vector<8x32xf32>
    %303 = arith.mulf %296, %302 : vector<8x32xf32>
    %cst_86 = arith.constant dense<0.000000e+00> : vector<8x64xf32>
    %304 = tpu.matmul %261, %1, %cst_86 {dimension_numbers = #tpu.dot_dimension_numbers<[1], [0], [0], [1], [0, 0, 1, 1], [], []>} : vector<8x32xf32>, vector<32x64xf32>, vector<8x64xf32> -> vector<8x64xf32>
    %305 = vector.broadcast %3 : vector<1x64xf32> to vector<8x64xf32>
    %306 = arith.addf %304, %305 : vector<8x64xf32>
    %cst_87 = arith.constant dense<0.000000e+00> : vector<8x64xf32>
    %307 = tpu.matmul %283, %2, %cst_87 {dimension_numbers = #tpu.dot_dimension_numbers<[1], [0], [0], [1], [0, 0, 1, 1], [], []>} : vector<8x16xf32>, vector<16x64xf32>, vector<8x64xf32> -> vector<8x64xf32>
    %308 = arith.addf %306, %307 : vector<8x64xf32>
    %cst_88 = arith.constant 5.000000e-01 : f32
    %309 = vector.broadcast %cst_88 : f32 to vector<8x64xf32>
    %310 = arith.mulf %309, %308 : vector<8x64xf32>
    %311 = math.tanh %310 : vector<8x64xf32>
    %cst_89 = arith.constant 5.000000e-01 : f32
    %312 = vector.broadcast %cst_89 : f32 to vector<8x64xf32>
    %313 = arith.mulf %312, %311 : vector<8x64xf32>
    %cst_90 = arith.constant 5.000000e-01 : f32
    %314 = vector.broadcast %cst_90 : f32 to vector<8x64xf32>
    %315 = arith.addf %313, %314 : vector<8x64xf32>
    %316 = vector.extract_strided_slice %315 {offsets = [0, 0], sizes = [8, 16], strides = [1, 1]} : vector<8x64xf32> to vector<8x16xf32>
    %317 = vector.extract_strided_slice %315 {offsets = [0, 16], sizes = [8, 16], strides = [1, 1]} : vector<8x64xf32> to vector<8x16xf32>
    %318 = vector.extract_strided_slice %315 {offsets = [0, 48], sizes = [8, 16], strides = [1, 1]} : vector<8x64xf32> to vector<8x16xf32>
    %319 = vector.extract_strided_slice %308 {offsets = [0, 32], sizes = [8, 16], strides = [1, 1]} : vector<8x64xf32> to vector<8x16xf32>
    %320 = math.tanh %319 : vector<8x16xf32>
    %321 = arith.mulf %317, %281 : vector<8x16xf32>
    %322 = arith.mulf %316, %320 : vector<8x16xf32>
    %323 = arith.addf %321, %322 : vector<8x16xf32>
    %324 = math.tanh %323 : vector<8x16xf32>
    %325 = arith.mulf %318, %324 : vector<8x16xf32>
    %c48 = arith.constant 48 : index
    %c0_91 = arith.constant 0 : index
    %326 = vector.load %arg7[%c48, %c0_91] : memref<64x16xf32, #tpu.memory_space<vmem>>, vector<8x16xf32>
    tpu.vector_store %arg7[%c48, %c0_91], %325 {strides = array<i32>} : memref<64x16xf32, #tpu.memory_space<vmem>>, vector<8x16xf32>,
    %cst_92 = arith.constant dense<0.000000e+00> : vector<8x64xf32>
    %327 = tpu.matmul %303, %1, %cst_92 {dimension_numbers = #tpu.dot_dimension_numbers<[1], [0], [0], [1], [0, 0, 1, 1], [], []>} : vector<8x32xf32>, vector<32x64xf32>, vector<8x64xf32> -> vector<8x64xf32>
    %328 = vector.broadcast %3 : vector<1x64xf32> to vector<8x64xf32>
    %329 = arith.addf %327, %328 : vector<8x64xf32>
    %cst_93 = arith.constant dense<0.000000e+00> : vector<8x64xf32>
    %330 = tpu.matmul %325, %2, %cst_93 {dimension_numbers = #tpu.dot_dimension_numbers<[1], [0], [0], [1], [0, 0, 1, 1], [], []>} : vector<8x16xf32>, vector<16x64xf32>, vector<8x64xf32> -> vector<8x64xf32>
    %331 = arith.addf %329, %330 : vector<8x64xf32>
    %cst_94 = arith.constant 5.000000e-01 : f32
    %332 = vector.broadcast %cst_94 : f32 to vector<8x64xf32>
    %333 = arith.mulf %332, %331 : vector<8x64xf32>
    %334 = math.tanh %333 : vector<8x64xf32>
    %cst_95 = arith.constant 5.000000e-01 : f32
    %335 = vector.broadcast %cst_95 : f32 to vector<8x64xf32>
    %336 = arith.mulf %335, %334 : vector<8x64xf32>
    %cst_96 = arith.constant 5.000000e-01 : f32
    %337 = vector.broadcast %cst_96 : f32 to vector<8x64xf32>
    %338 = arith.addf %336, %337 : vector<8x64xf32>
    %339 = vector.extract_strided_slice %338 {offsets = [0, 0], sizes = [8, 16], strides = [1, 1]} : vector<8x64xf32> to vector<8x16xf32>
    %340 = vector.extract_strided_slice %338 {offsets = [0, 16], sizes = [8, 16], strides = [1, 1]} : vector<8x64xf32> to vector<8x16xf32>
    %341 = vector.extract_strided_slice %338 {offsets = [0, 48], sizes = [8, 16], strides = [1, 1]} : vector<8x64xf32> to vector<8x16xf32>
    %342 = vector.extract_strided_slice %331 {offsets = [0, 32], sizes = [8, 16], strides = [1, 1]} : vector<8x64xf32> to vector<8x16xf32>
    %343 = math.tanh %342 : vector<8x16xf32>
    %344 = arith.mulf %340, %323 : vector<8x16xf32>
    %345 = arith.mulf %339, %343 : vector<8x16xf32>
    %346 = arith.addf %344, %345 : vector<8x16xf32>
    %347 = math.tanh %346 : vector<8x16xf32>
    %348 = arith.mulf %341, %347 : vector<8x16xf32>
    %c56 = arith.constant 56 : index
    %c0_97 = arith.constant 0 : index
    %349 = vector.load %arg7[%c56, %c0_97] : memref<64x16xf32, #tpu.memory_space<vmem>>, vector<8x16xf32>
    tpu.vector_store %arg7[%c56, %c0_97], %348 {strides = array<i32>} : memref<64x16xf32, #tpu.memory_space<vmem>>, vector<8x16xf32>,
    return
  }
}

</mosaic_0001>

<llo_original>
// kernel: lstm_variational_decoder_forward.1
$region0: #{lstm_variational_decoder_forward.1}
  #allocation0 [shape = 'u32[]', space=smem, size = 0x4, offset = 0x4, fixed_abs, tag = 'smem constant byte address 0x4 - core index']
  #allocation1 [shape = 'u32[144,128]{1,0:T(1,128)}', space=vmem, size = 0x12000, scoped, tag = 'internal scratch']
  %s0 = inlined_call_operand.vmem [shape: f32[8,8], index: 0, kind: input, shape index: {}]
  %s1 = inlined_call_operand.vmem [shape: f32[8,128], index: 1, kind: input, shape index: {}]
  %s2 = inlined_call_operand.hbm [shape: f32[32,128], index: 2, kind: input, shape index: {}]
  %s3 = inlined_call_operand.vmem [shape: f32[1,128], index: 3, kind: input, shape index: {}]
  %s4 = inlined_call_operand.vmem [shape: f32[32,64], index: 4, kind: input, shape index: {}]
  %s5 = inlined_call_operand.hbm [shape: f32[16,64], index: 5, kind: input, shape index: {}]
  %s6 = inlined_call_operand.vmem [shape: f32[1,64], index: 6, kind: input, shape index: {}]
  %s7 = inlined_call_operand.vmem [shape: f32[64,16], index: 7, kind: output, shape index: {}]
  %s8 = sld [smem:[#allocation0]]
  $region46: #{lstm_variational_decoder_forward.1} parent=0
    _
  %s10 = ssub.s32 1, %s8
  %s11 = scalar_select 0, %s10, %s8
  $region1: #{lstm_variational_decoder_forward.1} parent=0
    #allocation2 [shape = 'u8[16384]{0}', space=vmem, size = 0x4000, scoped, tag = 'input window, operand 2, single buffered']
    #allocation3 [shape = 's32[1]{0}', space=sflag, size = 0x4, scoped, tag = 'scoped memory for lstm_variational_decoder_forward.1']
    #allocation4 [shape = 'u8[8192]{0}', space=vmem, size = 0x2000, scoped, tag = 'input window, operand 5, single buffered']
    #allocation5 [shape = 's32[1]{0}', space=sflag, size = 0x4, scoped, tag = 'scoped memory for lstm_variational_decoder_forward.1']
    %12 = vsyncpa [#allocation3], 0
    %13 = vsyncpa [#allocation5], 0
    // Predicated region
    $region2: #{lstm_variational_decoder_forward.1} parent=1 // pred_check
      _
    $region3: #{lstm_variational_decoder_forward.1} parent=1 // pred_check_branch
      %15 = sbr.rel (0) target = $region5
    $region4: #{lstm_variational_decoder_forward.1} parent=1 // pred_region
      _
    $region5: #{lstm_variational_decoder_forward.1} parent=1 // pred_fallthru
      _
    // Predicated region
    $region6: #{lstm_variational_decoder_forward.1} parent=1 // pred_check
      _
    $region7: #{lstm_variational_decoder_forward.1} parent=1 // pred_check_branch
      %17 = sbr.rel (0) target = $region9
    $region8: #{lstm_variational_decoder_forward.1} parent=1 // pred_region
      _
    $region9: #{lstm_variational_decoder_forward.1} parent=1 // pred_fallthru
      _
    // Predicated region
    $region10: #{lstm_variational_decoder_forward.1} parent=1 // pred_check
      _
    $region11: #{lstm_variational_decoder_forward.1} parent=1 // pred_check_branch
      %19 = sbr.rel (0) target = $region13
    $region12: #{lstm_variational_decoder_forward.1} parent=1 // pred_region
      %s21 = ssub.s32 512, 512
      %22 = vsyncadd [#allocation3], %s21
      %s23 = sshll.u32 [#allocation2], 4
      %s24 = int_to_ptr.vmem [resolvable:$true] %s23
      %29 = dma.hbm_to_vmem [thread:$0]  %s2, 512, %s24, [#allocation3], 128, 128, 8
    $region13: #{lstm_variational_decoder_forward.1} parent=1 // pred_fallthru
      _
    // Predicated region
    $region14: #{lstm_variational_decoder_forward.1} parent=1 // pred_check
      _
    $region15: #{lstm_variational_decoder_forward.1} parent=1 // pred_check_branch
      %31 = sbr.rel (0) target = $region17
    $region16: #{lstm_variational_decoder_forward.1} parent=1 // pred_region
      _
    $region17: #{lstm_variational_decoder_forward.1} parent=1 // pred_fallthru
      _
    // Predicated region
    $region18: #{lstm_variational_decoder_forward.1} parent=1 // pred_check
      _
    $region19: #{lstm_variational_decoder_forward.1} parent=1 // pred_check_branch
      %33 = sbr.rel (0) target = $region21
    $region20: #{lstm_variational_decoder_forward.1} parent=1 // pred_region
      _
    $region21: #{lstm_variational_decoder_forward.1} parent=1 // pred_fallthru
      _
    // Predicated region
    $region22: #{lstm_variational_decoder_forward.1} parent=1 // pred_check
      _
    $region23: #{lstm_variational_decoder_forward.1} parent=1 // pred_check_branch
      %35 = sbr.rel (0) target = $region25
    $region24: #{lstm_variational_decoder_forward.1} parent=1 // pred_region
      %s37 = ssub.s32 256, 256
      %38 = vsyncadd [#allocation5], %s37
      %s39 = sshll.u32 [#allocation4], 4
      %s40 = int_to_ptr.vmem [resolvable:$true] %s39
      %45 = dma.hbm_to_vmem [thread:$0]  %s5, 256, %s40, [#allocation5], 128, 128, 8
    $region25: #{lstm_variational_decoder_forward.1} parent=1 // pred_fallthru
      _
    // Predicated region
    $region26: #{lstm_variational_decoder_forward.1} parent=1 // pred_check
      _
    $region27: #{lstm_variational_decoder_forward.1} parent=1 // pred_check_branch
      %47 = sbr.rel (0) target = $region29
    $region28: #{lstm_variational_decoder_forward.1} parent=1 // pred_region
      _
    $region29: #{lstm_variational_decoder_forward.1} parent=1 // pred_fallthru
      _
    // Predicated region
    $region30: #{lstm_variational_decoder_forward.1} parent=1 // pred_check
      _
    $region31: #{lstm_variational_decoder_forward.1} parent=1 // pred_check_branch
      %49 = sbr.rel (0) target = $region33
    $region32: #{lstm_variational_decoder_forward.1} parent=1 // pred_region
      %50 = dma.done [#allocation3], 512
    $region33: #{lstm_variational_decoder_forward.1} parent=1 // pred_fallthru
      _
    // Predicated region
    $region34: #{lstm_variational_decoder_forward.1} parent=1 // pred_check
      _
    $region35: #{lstm_variational_decoder_forward.1} parent=1 // pred_check_branch
      %52 = sbr.rel (0) target = $region37
    $region36: #{lstm_variational_decoder_forward.1} parent=1 // pred_region
      %53 = dma.done [#allocation5], 256
    $region37: #{lstm_variational_decoder_forward.1} parent=1 // pred_fallthru
      _
    %v54 = vld [vmem:[#allocation2] sm:$0xff]
    %v55 = vld [vmem:[#allocation2 + $0x8] sm:$0xff]
    %v56 = vld [vmem:[#allocation2 + $0x10] sm:$0xff]
    %v57 = vld [vmem:[#allocation2 + $0x18] sm:$0xff]
    %v58 = vld [vmem:[%s4] sm:$0xff]
    %v59 = vld [vmem:[%s4 + $0x8] sm:$0xff]
    %v60 = vld [vmem:[%s4 + $0x10] sm:$0xff]
    %v61 = vld [vmem:[%s4 + $0x18] sm:$0xff]
    %v62 = vld [vmem:[#allocation4] sm:$0xff]
    %v63 = vld [vmem:[#allocation4 + $0x8] sm:$0xff]
    %v64 = vld [vmem:[%s6] sm:$0x1]
    %v65 = vld [vmem:[%s0] sm:$0xff]
    %v66 = vld [vmem:[%s1] sm:$0xff]
    %v67 = vld [vmem:[%s3] sm:$0x1]
    %v69 = vlaneseq
    %v70 = vshrl.u32 %v69, 7
    %v71 = vsub.s32 0, %v70
    %v72 = vrot.slane %v67, %v71
    %vm74 = vcmask 64512
    %v76 = vsel %vm74, %v65, 0
    %78 = vmatprep.subr.mxu0 0.0
    %79 = vmatpush1.msra.mxu0 0.0
    %80 = vmatprep.subr.mxu0 0.0
    %81 = vmatpush1.msra.mxu0 0.0
    %82 = vmatprep.subr.mxu0 0.0
    %83 = vmatpush1.msra.mxu0 0.0
    %84 = vmatprep.subr.mxu0 0.0
    %85 = vmatpush1.msra.mxu0 0.0
    %86 = vmatprep.subr.mxu0 0.0
    %87 = vmatpush1.msra.mxu0 0.0
    %88 = vmatprep.subr.mxu0 0.0
    %89 = vmatpush1.msra.mxu0 0.0
    %90 = vmatprep.subr.mxu0 0.0
    %91 = vmatpush1.msra.mxu0 0.0
    %92 = vmatprep.subr.mxu0 0.0
    %93 = vmatpush1.msra.mxu0 0.0
    %94 = vmatprep.subr.mxu0 0.0
    %95 = vmatpush1.msra.mxu0 0.0
    %96 = vmatprep.subr.mxu0 0.0
    %97 = vmatpush1.msra.mxu0 0.0
    %98 = vmatprep.subr.mxu0 0.0
    %99 = vmatpush1.msra.mxu0 0.0
    %100 = vmatprep.subr.mxu0 0.0
    %101 = vmatpush1.msra.mxu0 0.0
    %102 = vmatprep.subr.mxu0 0.0
    %103 = vmatpush1.msra.mxu0 0.0
    %104 = vmatprep.subr.mxu0 0.0
    %105 = vmatpush1.msra.mxu0 0.0
    %106 = vmatprep.subr.mxu0 0.0
    %107 = vmatpush1.msra.mxu0 0.0
    %108 = vmatprep.subr.mxu0 0.0
    %109 = vmatpush1.msra.mxu0 %v66
    %110 = vmatprep.subr.mxu0 0.0
    %111 = vmatpush2.msra.mxu0 0.0
    %112 = vmatprep.subr.mxu0 0.0
    %113 = vmatpush2.msra.mxu0 0.0
    %114 = vmatprep.subr.mxu0 0.0
    %115 = vmatpush2.msra.mxu0 0.0
    %116 = vmatprep.subr.mxu0 0.0
    %117 = vmatpush2.msra.mxu0 0.0
    %118 = vmatprep.subr.mxu0 0.0
    %119 = vmatpush2.msra.mxu0 0.0
    %120 = vmatprep.subr.mxu0 0.0
    %121 = vmatpush2.msra.mxu0 0.0
    %122 = vmatprep.subr.mxu0 0.0
    %123 = vmatpush2.msra.mxu0 0.0
    %124 = vmatprep.subr.mxu0 0.0
    %125 = vmatpush2.msra.mxu0 0.0
    %126 = vmatprep.subr.mxu0 0.0
    %127 = vmatpush2.msra.mxu0 0.0
    %128 = vmatprep.subr.mxu0 0.0
    %129 = vmatpush2.msra.mxu0 0.0
    %130 = vmatprep.subr.mxu0 0.0
    %131 = vmatpush2.msra.mxu0 0.0
    %132 = vmatprep.subr.mxu0 0.0
    %133 = vmatpush2.msra.mxu0 0.0
    %134 = vmatprep.subr.mxu0 0.0
    %135 = vmatpush2.msra.mxu0 0.0
    %136 = vmatprep.subr.mxu0 0.0
    %137 = vmatpush2.msra.mxu0 0.0
    %138 = vmatprep.subr.mxu0 0.0
    %139 = vmatpush2.msra.mxu0 0.0
    %140 = vmatprep.subr.mxu0 0.0
    %141 = vmatpush2.msra.mxu0 0.0
    %142 = vmatprep.mubr.f32.mxu0 0.0
    %143 = vmatmul.mubr.f32.gmra.mxu0 %v76
    %v144 = vpop.f32.mrf.mxu0
    %v145 = vadd.f32 %v72, %v144
    %v146 = vpop.f32.mrf.mxu0
    %147 = vdwg.mxu0
    %vm148 = vcmask 261120
    %v150 = vsel %vm148, 0.0, 0
    %152 = vmatprep.subr.mxu0 0.0
    %153 = vmatpush1.msra.mxu0 0.0
    %154 = vmatprep.subr.mxu0 0.0
    %155 = vmatpush1.msra.mxu0 0.0
    %156 = vmatprep.subr.mxu0 0.0
    %157 = vmatpush1.msra.mxu0 0.0
    %158 = vmatprep.subr.mxu0 0.0
    %159 = vmatpush1.msra.mxu0 0.0
    %160 = vmatprep.subr.mxu0 0.0
    %161 = vmatpush1.msra.mxu0 0.0
    %162 = vmatprep.subr.mxu0 0.0
    %163 = vmatpush1.msra.mxu0 0.0
    %164 = vmatprep.subr.mxu0 0.0
    %165 = vmatpush1.msra.mxu0 0.0
    %166 = vmatprep.subr.mxu0 0.0
    %167 = vmatpush1.msra.mxu0 0.0
    %168 = vmatprep.subr.mxu0 0.0
    %169 = vmatpush1.msra.mxu0 0.0
    %170 = vmatprep.subr.mxu0 0.0
    %171 = vmatpush1.msra.mxu0 0.0
    %172 = vmatprep.subr.mxu0 0.0
    %173 = vmatpush1.msra.mxu0 0.0
    %174 = vmatprep.subr.mxu0 0.0
    %175 = vmatpush1.msra.mxu0 0.0
    %176 = vmatprep.subr.mxu0 0.0
    %177 = vmatpush1.msra.mxu0 %v57
    %178 = vmatprep.subr.mxu0 0.0
    %179 = vmatpush1.msra.mxu0 %v56
    %180 = vmatprep.subr.mxu0 0.0
    %181 = vmatpush1.msra.mxu0 %v55
    %182 = vmatprep.subr.mxu0 0.0
    %183 = vmatpush1.msra.mxu0 %v54
    %184 = vmatprep.subr.mxu0 0.0
    %185 = vmatpush2.msra.mxu0 0.0
    %186 = vmatprep.subr.mxu0 0.0
    %187 = vmatpush2.msra.mxu0 0.0
    %188 = vmatprep.subr.mxu0 0.0
    %189 = vmatpush2.msra.mxu0 0.0
    %190 = vmatprep.subr.mxu0 0.0
    %191 = vmatpush2.msra.mxu0 0.0
    %192 = vmatprep.subr.mxu0 0.0
    %193 = vmatpush2.msra.mxu0 0.0
    %194 = vmatprep.subr.mxu0 0.0
    %195 = vmatpush2.msra.mxu0 0.0
    %196 = vmatprep.subr.mxu0 0.0
    %197 = vmatpush2.msra.mxu0 0.0
    %198 = vmatprep.subr.mxu0 0.0
    %199 = vmatpush2.msra.mxu0 0.0
    %200 = vmatprep.subr.mxu0 0.0
    %201 = vmatpush2.msra.mxu0 0.0
    %202 = vmatprep.subr.mxu0 0.0
    %203 = vmatpush2.msra.mxu0 0.0
    %204 = vmatprep.subr.mxu0 0.0
    %205 = vmatpush2.msra.mxu0 0.0
    %206 = vmatprep.subr.mxu0 0.0
    %207 = vmatpush2.msra.mxu0 0.0
    %208 = vmatprep.subr.mxu0 0.0
    %209 = vmatpush2.msra.mxu0 0.0
    %210 = vmatprep.subr.mxu0 0.0
    %211 = vmatpush2.msra.mxu0 0.0
    %212 = vmatprep.subr.mxu0 0.0
    %213 = vmatpush2.msra.mxu0 0.0
    %214 = vmatprep.subr.mxu0 0.0
    %215 = vmatpush2.msra.mxu0 0.0
    %216 = vmatprep.mubr.f32.mxu0 0.0
    %217 = vmatmul.mubr.f32.gmra.mxu0 %v150
    %v218 = vpop.f32.mrf.mxu0
    %v219 = vadd.f32 0.0, %v218
    %v220 = vpop.f32.mrf.mxu0
    %221 = vdwg.mxu0
    %v222 = vadd.f32 %v145, %v219
    %v223 = vmul.f32 %v222, 0.5
    %v224 = vtanh.pop %v223
    %v225 = vmul.f32 %v224, 0.5
    %v226 = vadd.f32 %v225, 0.5
    %v227 = vtanh.pop %v222
    %v228 = vmul.f32 %v226, 0.0
    %230 = vrot.lane.b32.xlu0 %v227, 64
    %v231 = vpop.permute.xlu0 %230
    %v233 = vmul.f32 %v226, %v231
    %235 = vrot.lane.b32.xlu0 %v233, 32
    %v236 = vpop.permute.xlu0 %235
    %v238 = vadd.f32 %v228, %v236
    %v239 = vtanh.pop %v238
    %241 = vrot.lane.b32.xlu0 %v239, 64
    %v242 = vpop.permute.xlu0 %241
    %v244 = vmul.f32 %v226, %v242
    %246 = vrot.lane.b32.xlu0 %v244, 32
    %v247 = vpop.permute.xlu0 %246
    %v248 = vsel %vm148, %v247, 0
    %250 = vmatprep.subr.mxu0 0.0
    %251 = vmatpush1.msra.mxu0 0.0
    %252 = vmatprep.subr.mxu0 0.0
    %253 = vmatpush1.msra.mxu0 0.0
    %254 = vmatprep.subr.mxu0 0.0
    %255 = vmatpush1.msra.mxu0 0.0
    %256 = vmatprep.subr.mxu0 0.0
    %257 = vmatpush1.msra.mxu0 0.0
    %258 = vmatprep.subr.mxu0 0.0
    %259 = vmatpush1.msra.mxu0 0.0
    %260 = vmatprep.subr.mxu0 0.0
    %261 = vmatpush1.msra.mxu0 0.0
    %262 = vmatprep.subr.mxu0 0.0
    %263 = vmatpush1.msra.mxu0 0.0
    %264 = vmatprep.subr.mxu0 0.0
    %265 = vmatpush1.msra.mxu0 0.0
    %266 = vmatprep.subr.mxu0 0.0
    %267 = vmatpush1.msra.mxu0 0.0
    %268 = vmatprep.subr.mxu0 0.0
    %269 = vmatpush1.msra.mxu0 0.0
    %270 = vmatprep.subr.mxu0 0.0
    %271 = vmatpush1.msra.mxu0 0.0
    %272 = vmatprep.subr.mxu0 0.0
    %273 = vmatpush1.msra.mxu0 0.0
    %274 = vmatprep.subr.mxu0 0.0
    %275 = vmatpush1.msra.mxu0 %v57
    %276 = vmatprep.subr.mxu0 0.0
    %277 = vmatpush1.msra.mxu0 %v56
    %278 = vmatprep.subr.mxu0 0.0
    %279 = vmatpush1.msra.mxu0 %v55
    %280 = vmatprep.subr.mxu0 0.0
    %281 = vmatpush1.msra.mxu0 %v54
    %282 = vmatprep.subr.mxu0 0.0
    %283 = vmatpush2.msra.mxu0 0.0
    %284 = vmatprep.subr.mxu0 0.0
    %285 = vmatpush2.msra.mxu0 0.0
    %286 = vmatprep.subr.mxu0 0.0
    %287 = vmatpush2.msra.mxu0 0.0
    %288 = vmatprep.subr.mxu0 0.0
    %289 = vmatpush2.msra.mxu0 0.0
    %290 = vmatprep.subr.mxu0 0.0
    %291 = vmatpush2.msra.mxu0 0.0
    %292 = vmatprep.subr.mxu0 0.0
    %293 = vmatpush2.msra.mxu0 0.0
    %294 = vmatprep.subr.mxu0 0.0
    %295 = vmatpush2.msra.mxu0 0.0
    %296 = vmatprep.subr.mxu0 0.0
    %297 = vmatpush2.msra.mxu0 0.0
    %298 = vmatprep.subr.mxu0 0.0
    %299 = vmatpush2.msra.mxu0 0.0
    %300 = vmatprep.subr.mxu0 0.0
    %301 = vmatpush2.msra.mxu0 0.0
    %302 = vmatprep.subr.mxu0 0.0
    %303 = vmatpush2.msra.mxu0 0.0
    %304 = vmatprep.subr.mxu0 0.0
    %305 = vmatpush2.msra.mxu0 0.0
    %306 = vmatprep.subr.mxu0 0.0
    %307 = vmatpush2.msra.mxu0 0.0
    %308 = vmatprep.subr.mxu0 0.0
    %309 = vmatpush2.msra.mxu0 0.0
    %310 = vmatprep.subr.mxu0 0.0
    %311 = vmatpush2.msra.mxu0 0.0
    %312 = vmatprep.subr.mxu0 0.0
    %313 = vmatpush2.msra.mxu0 0.0
    %314 = vmatprep.mubr.f32.mxu0 0.0
    %315 = vmatmul.mubr.f32.gmra.mxu0 %v248
    %v316 = vpop.f32.mrf.mxu0
    %v317 = vadd.f32 0.0, %v316
    %v318 = vpop.f32.mrf.mxu0
    %319 = vdwg.mxu0
    %v320 = vadd.f32 %v145, %v317
    %v321 = vmul.f32 %v320, 0.5
    %v322 = vtanh.pop %v321
    %v323 = vmul.f32 %v322, 0.5
    %v324 = vadd.f32 %v323, 0.5
    %v325 = vtanh.pop %v320
    %v326 = vmul.f32 %v324, %v238
    %328 = vrot.lane.b32.xlu0 %v325, 64
    %v329 = vpop.permute.xlu0 %328
    %v331 = vmul.f32 %v324, %v329
    %333 = vrot.lane.b32.xlu0 %v331, 32
    %v334 = vpop.permute.xlu0 %333
    %v336 = vadd.f32 %v326, %v334
    %v337 = vtanh.pop %v336
    %339 = vrot.lane.b32.xlu0 %v337, 64
    %v340 = vpop.permute.xlu0 %339
    %v342 = vmul.f32 %v324, %v340
    %v344 = vlaneseq
    %v345 = vshrl.u32 %v344, 7
    %v346 = vsub.s32 0, %v345
    %v347 = vrot.slane %v64, %v346
    %349 = vmatprep.subr.mxu0 0.0
    %350 = vmatpush1.msra.mxu0 0.0
    %351 = vmatprep.subr.mxu0 0.0
    %352 = vmatpush1.msra.mxu0 0.0
    %353 = vmatprep.subr.mxu0 0.0
    %354 = vmatpush1.msra.mxu0 0.0
    %355 = vmatprep.subr.mxu0 0.0
    %356 = vmatpush1.msra.mxu0 0.0
    %357 = vmatprep.subr.mxu0 0.0
    %358 = vmatpush1.msra.mxu0 0.0
    %359 = vmatprep.subr.mxu0 0.0
    %360 = vmatpush1.msra.mxu0 0.0
    %361 = vmatprep.subr.mxu0 0.0
    %362 = vmatpush1.msra.mxu0 0.0
    %363 = vmatprep.subr.mxu0 0.0
    %364 = vmatpush1.msra.mxu0 0.0
    %365 = vmatprep.subr.mxu0 0.0
    %366 = vmatpush1.msra.mxu0 0.0
    %367 = vmatprep.subr.mxu0 0.0
    %368 = vmatpush1.msra.mxu0 0.0
    %369 = vmatprep.subr.mxu0 0.0
    %370 = vmatpush1.msra.mxu0 0.0
    %371 = vmatprep.subr.mxu0 0.0
    %372 = vmatpush1.msra.mxu0 0.0
    %373 = vmatprep.subr.mxu0 0.0
    %374 = vmatpush1.msra.mxu0 %v61
    %375 = vmatprep.subr.mxu0 0.0
    %376 = vmatpush1.msra.mxu0 %v60
    %377 = vmatprep.subr.mxu0 0.0
    %378 = vmatpush1.msra.mxu0 %v59
    %379 = vmatprep.subr.mxu0 0.0
    %380 = vmatpush1.msra.mxu0 %v58
    %381 = vmatprep.subr.mxu0 0.0
    %382 = vmatpush2.msra.mxu0 0.0
    %383 = vmatprep.subr.mxu0 0.0
    %384 = vmatpush2.msra.mxu0 0.0
    %385 = vmatprep.subr.mxu0 0.0
    %386 = vmatpush2.msra.mxu0 0.0
    %387 = vmatprep.subr.mxu0 0.0
    %388 = vmatpush2.msra.mxu0 0.0
    %389 = vmatprep.subr.mxu0 0.0
    %390 = vmatpush2.msra.mxu0 0.0
    %391 = vmatprep.subr.mxu0 0.0
    %392 = vmatpush2.msra.mxu0 0.0
    %393 = vmatprep.subr.mxu0 0.0
    %394 = vmatpush2.msra.mxu0 0.0
    %395 = vmatprep.subr.mxu0 0.0
    %396 = vmatpush2.msra.mxu0 0.0
    %397 = vmatprep.subr.mxu0 0.0
    %398 = vmatpush2.msra.mxu0 0.0
    %399 = vmatprep.subr.mxu0 0.0
    %400 = vmatpush2.msra.mxu0 0.0
    %401 = vmatprep.subr.mxu0 0.0
    %402 = vmatpush2.msra.mxu0 0.0
    %403 = vmatprep.subr.mxu0 0.0
    %404 = vmatpush2.msra.mxu0 0.0
    %405 = vmatprep.subr.mxu0 0.0
    %406 = vmatpush2.msra.mxu0 0.0
    %407 = vmatprep.subr.mxu0 0.0
    %408 = vmatpush2.msra.mxu0 0.0
    %409 = vmatprep.subr.mxu0 0.0
    %410 = vmatpush2.msra.mxu0 0.0
    %411 = vmatprep.subr.mxu0 0.0
    %412 = vmatpush2.msra.mxu0 0.0
    %413 = vmatprep.mubr.f32.mxu0 0.0
    %414 = vmatmul.mubr.f32.gmra.mxu0 %v248
    %v415 = vpop.f32.mrf.mxu0
    %v416 = vadd.f32 %v347, %v415
    %v417 = vpop.f32.mrf.mxu0
    %418 = vdwg.mxu0
    %vm419 = vcmask 130048
    %v420 = vsel %vm419, 0.0, 0
    %422 = vmatprep.subr.mxu0 0.0
    %423 = vmatpush1.msra.mxu0 0.0
    %424 = vmatprep.subr.mxu0 0.0
    %425 = vmatpush1.msra.mxu0 0.0
    %426 = vmatprep.subr.mxu0 0.0
    %427 = vmatpush1.msra.mxu0 0.0
    %428 = vmatprep.subr.mxu0 0.0
    %429 = vmatpush1.msra.mxu0 0.0
    %430 = vmatprep.subr.mxu0 0.0
    %431 = vmatpush1.msra.mxu0 0.0
    %432 = vmatprep.subr.mxu0 0.0
    %433 = vmatpush1.msra.mxu0 0.0
    %434 = vmatprep.subr.mxu0 0.0
    %435 = vmatpush1.msra.mxu0 0.0
    %436 = vmatprep.subr.mxu0 0.0
    %437 = vmatpush1.msra.mxu0 0.0
    %438 = vmatprep.subr.mxu0 0.0
    %439 = vmatpush1.msra.mxu0 0.0
    %440 = vmatprep.subr.mxu0 0.0
    %441 = vmatpush1.msra.mxu0 0.0
    %442 = vmatprep.subr.mxu0 0.0
    %443 = vmatpush1.msra.mxu0 0.0
    %444 = vmatprep.subr.mxu0 0.0
    %445 = vmatpush1.msra.mxu0 0.0
    %446 = vmatprep.subr.mxu0 0.0
    %447 = vmatpush1.msra.mxu0 0.0
    %448 = vmatprep.subr.mxu0 0.0
    %449 = vmatpush1.msra.mxu0 0.0
    %450 = vmatprep.subr.mxu0 0.0
    %451 = vmatpush1.msra.mxu0 %v63
    %452 = vmatprep.subr.mxu0 0.0
    %453 = vmatpush1.msra.mxu0 %v62
    %454 = vmatprep.subr.mxu0 0.0
    %455 = vmatpush2.msra.mxu0 0.0
    %456 = vmatprep.subr.mxu0 0.0
    %457 = vmatpush2.msra.mxu0 0.0
    %458 = vmatprep.subr.mxu0 0.0
    %459 = vmatpush2.msra.mxu0 0.0
    %460 = vmatprep.subr.mxu0 0.0
    %461 = vmatpush2.msra.mxu0 0.0
    %462 = vmatprep.subr.mxu0 0.0
    %463 = vmatpush2.msra.mxu0 0.0
    %464 = vmatprep.subr.mxu0 0.0
    %465 = vmatpush2.msra.mxu0 0.0
    %466 = vmatprep.subr.mxu0 0.0
    %467 = vmatpush2.msra.mxu0 0.0
    %468 = vmatprep.subr.mxu0 0.0
    %469 = vmatpush2.msra.mxu0 0.0
    %470 = vmatprep.subr.mxu0 0.0
    %471 = vmatpush2.msra.mxu0 0.0
    %472 = vmatprep.subr.mxu0 0.0
    %473 = vmatpush2.msra.mxu0 0.0
    %474 = vmatprep.subr.mxu0 0.0
    %475 = vmatpush2.msra.mxu0 0.0
    %476 = vmatprep.subr.mxu0 0.0
    %477 = vmatpush2.msra.mxu0 0.0
    %478 = vmatprep.subr.mxu0 0.0
    %479 = vmatpush2.msra.mxu0 0.0
    %480 = vmatprep.subr.mxu0 0.0
    %481 = vmatpush2.msra.mxu0 0.0
    %482 = vmatprep.subr.mxu0 0.0
    %483 = vmatpush2.msra.mxu0 0.0
    %484 = vmatprep.subr.mxu0 0.0
    %485 = vmatpush2.msra.mxu0 0.0
    %486 = vmatprep.mubr.f32.mxu0 0.0
    %487 = vmatmul.mubr.f32.gmra.mxu0 %v420
    %v488 = vpop.f32.mrf.mxu0
    %v489 = vadd.f32 0.0, %v488
    %v490 = vpop.f32.mrf.mxu0
    %491 = vdwg.mxu0
    %v492 = vadd.f32 %v416, %v489
    %v493 = vmul.f32 %v492, 0.5
    %v494 = vtanh.pop %v493
    %v495 = vmul.f32 %v494, 0.5
    %v496 = vadd.f32 %v495, 0.5
    %v497 = vtanh.pop %v492
    %v498 = vmul.f32 %v496, 0.0
    %500 = vrot.lane.b32.xlu0 %v497, 96
    %v501 = vpop.permute.xlu0 %500
    %v503 = vmul.f32 %v496, %v501
    %505 = vrot.lane.b32.xlu0 %v503, 16
    %v506 = vpop.permute.xlu0 %505
    %v508 = vadd.f32 %v498, %v506
    %v509 = vtanh.pop %v508
    %511 = vrot.lane.b32.xlu0 %v509, 32
    %v512 = vpop.permute.xlu0 %511
    %v514 = vmul.f32 %v496, %v512
    %516 = vrot.lane.b32.xlu0 %v514, 80
    %v517 = vpop.permute.xlu0 %516
    %519 = vst.msk [vmem:[%s7] sm:$0xff] %vm419, %v517
    %521 = vrot.lane.b32.xlu0 %v342, 32
    %v522 = vpop.permute.xlu0 %521
    %v523 = vsel %vm148, %v522, 0
    %525 = vmatprep.subr.mxu0 0.0
    %526 = vmatpush1.msra.mxu0 0.0
    %527 = vmatprep.subr.mxu0 0.0
    %528 = vmatpush1.msra.mxu0 0.0
    %529 = vmatprep.subr.mxu0 0.0
    %530 = vmatpush1.msra.mxu0 0.0
    %531 = vmatprep.subr.mxu0 0.0
    %532 = vmatpush1.msra.mxu0 0.0
    %533 = vmatprep.subr.mxu0 0.0
    %534 = vmatpush1.msra.mxu0 0.0
    %535 = vmatprep.subr.mxu0 0.0
    %536 = vmatpush1.msra.mxu0 0.0
    %537 = vmatprep.subr.mxu0 0.0
    %538 = vmatpush1.msra.mxu0 0.0
    %539 = vmatprep.subr.mxu0 0.0
    %540 = vmatpush1.msra.mxu0 0.0
    %541 = vmatprep.subr.mxu0 0.0
    %542 = vmatpush1.msra.mxu0 0.0
    %543 = vmatprep.subr.mxu0 0.0
    %544 = vmatpush1.msra.mxu0 0.0
    %545 = vmatprep.subr.mxu0 0.0
    %546 = vmatpush1.msra.mxu0 0.0
    %547 = vmatprep.subr.mxu0 0.0
    %548 = vmatpush1.msra.mxu0 0.0
    %549 = vmatprep.subr.mxu0 0.0
    %550 = vmatpush1.msra.mxu0 %v57
    %551 = vmatprep.subr.mxu0 0.0
    %552 = vmatpush1.msra.mxu0 %v56
    %553 = vmatprep.subr.mxu0 0.0
    %554 = vmatpush1.msra.mxu0 %v55
    %555 = vmatprep.subr.mxu0 0.0
    %556 = vmatpush1.msra.mxu0 %v54
    %557 = vmatprep.subr.mxu0 0.0
    %558 = vmatpush2.msra.mxu0 0.0
    %559 = vmatprep.subr.mxu0 0.0
    %560 = vmatpush2.msra.mxu0 0.0
    %561 = vmatprep.subr.mxu0 0.0
    %562 = vmatpush2.msra.mxu0 0.0
    %563 = vmatprep.subr.mxu0 0.0
    %564 = vmatpush2.msra.mxu0 0.0
    %565 = vmatprep.subr.mxu0 0.0
    %566 = vmatpush2.msra.mxu0 0.0
    %567 = vmatprep.subr.mxu0 0.0
    %568 = vmatpush2.msra.mxu0 0.0
    %569 = vmatprep.subr.mxu0 0.0
    %570 = vmatpush2.msra.mxu0 0.0
    %571 = vmatprep.subr.mxu0 0.0
    %572 = vmatpush2.msra.mxu0 0.0
    %573 = vmatprep.subr.mxu0 0.0
    %574 = vmatpush2.msra.mxu0 0.0
    %575 = vmatprep.subr.mxu0 0.0
    %576 = vmatpush2.msra.mxu0 0.0
    %577 = vmatprep.subr.mxu0 0.0
    %578 = vmatpush2.msra.mxu0 0.0
    %579 = vmatprep.subr.mxu0 0.0
    %580 = vmatpush2.msra.mxu0 0.0
    %581 = vmatprep.subr.mxu0 0.0
    %582 = vmatpush2.msra.mxu0 0.0
    %583 = vmatprep.subr.mxu0 0.0
    %584 = vmatpush2.msra.mxu0 0.0
    %585 = vmatprep.subr.mxu0 0.0
    %586 = vmatpush2.msra.mxu0 0.0
    %587 = vmatprep.subr.mxu0 0.0
    %588 = vmatpush2.msra.mxu0 0.0
    %589 = vmatprep.mubr.f32.mxu0 0.0
    %590 = vmatmul.mubr.f32.gmra.mxu0 %v523
    %v591 = vpop.f32.mrf.mxu0
    %v592 = vadd.f32 0.0, %v591
    %v593 = vpop.f32.mrf.mxu0
    %594 = vdwg.mxu0
    %v595 = vadd.f32 %v145, %v592
    %v596 = vmul.f32 %v595, 0.5
    %v597 = vtanh.pop %v596
    %v598 = vmul.f32 %v597, 0.5
    %v599 = vadd.f32 %v598, 0.5
    %v600 = vtanh.pop %v595
    %v601 = vmul.f32 %v599, %v336
    %603 = vrot.lane.b32.xlu0 %v600, 64
    %v604 = vpop.permute.xlu0 %603
    %v606 = vmul.f32 %v599, %v604
    %608 = vrot.lane.b32.xlu0 %v606, 32
    %v609 = vpop.permute.xlu0 %608
    %v611 = vadd.f32 %v601, %v609
    %v612 = vtanh.pop %v611
    %614 = vrot.lane.b32.xlu0 %v612, 64
    %v615 = vpop.permute.xlu0 %614
    %v617 = vmul.f32 %v599, %v615
    %618 = vmatprep.subr.mxu0 0.0
    %619 = vmatpush1.msra.mxu0 0.0
    %620 = vmatprep.subr.mxu0 0.0
    %621 = vmatpush1.msra.mxu0 0.0
    %622 = vmatprep.subr.mxu0 0.0
    %623 = vmatpush1.msra.mxu0 0.0
    %624 = vmatprep.subr.mxu0 0.0
    %625 = vmatpush1.msra.mxu0 0.0
    %626 = vmatprep.subr.mxu0 0.0
    %627 = vmatpush1.msra.mxu0 0.0
    %628 = vmatprep.subr.mxu0 0.0
    %629 = vmatpush1.msra.mxu0 0.0
    %630 = vmatprep.subr.mxu0 0.0
    %631 = vmatpush1.msra.mxu0 0.0
    %632 = vmatprep.subr.mxu0 0.0
    %633 = vmatpush1.msra.mxu0 0.0
    %634 = vmatprep.subr.mxu0 0.0
    %635 = vmatpush1.msra.mxu0 0.0
    %636 = vmatprep.subr.mxu0 0.0
    %637 = vmatpush1.msra.mxu0 0.0
    %638 = vmatprep.subr.mxu0 0.0
    %639 = vmatpush1.msra.mxu0 0.0
    %640 = vmatprep.subr.mxu0 0.0
    %641 = vmatpush1.msra.mxu0 0.0
    %642 = vmatprep.subr.mxu0 0.0
    %643 = vmatpush1.msra.mxu0 %v61
    %644 = vmatprep.subr.mxu0 0.0
    %645 = vmatpush1.msra.mxu0 %v60
    %646 = vmatprep.subr.mxu0 0.0
    %647 = vmatpush1.msra.mxu0 %v59
    %648 = vmatprep.subr.mxu0 0.0
    %649 = vmatpush1.msra.mxu0 %v58
    %650 = vmatprep.subr.mxu0 0.0
    %651 = vmatpush2.msra.mxu0 0.0
    %652 = vmatprep.subr.mxu0 0.0
    %653 = vmatpush2.msra.mxu0 0.0
    %654 = vmatprep.subr.mxu0 0.0
    %655 = vmatpush2.msra.mxu0 0.0
    %656 = vmatprep.subr.mxu0 0.0
    %657 = vmatpush2.msra.mxu0 0.0
    %658 = vmatprep.subr.mxu0 0.0
    %659 = vmatpush2.msra.mxu0 0.0
    %660 = vmatprep.subr.mxu0 0.0
    %661 = vmatpush2.msra.mxu0 0.0
    %662 = vmatprep.subr.mxu0 0.0
    %663 = vmatpush2.msra.mxu0 0.0
    %664 = vmatprep.subr.mxu0 0.0
    %665 = vmatpush2.msra.mxu0 0.0
    %666 = vmatprep.subr.mxu0 0.0
    %667 = vmatpush2.msra.mxu0 0.0
    %668 = vmatprep.subr.mxu0 0.0
    %669 = vmatpush2.msra.mxu0 0.0
    %670 = vmatprep.subr.mxu0 0.0
    %671 = vmatpush2.msra.mxu0 0.0
    %672 = vmatprep.subr.mxu0 0.0
    %673 = vmatpush2.msra.mxu0 0.0
    %674 = vmatprep.subr.mxu0 0.0
    %675 = vmatpush2.msra.mxu0 0.0
    %676 = vmatprep.subr.mxu0 0.0
    %677 = vmatpush2.msra.mxu0 0.0
    %678 = vmatprep.subr.mxu0 0.0
    %679 = vmatpush2.msra.mxu0 0.0
    %680 = vmatprep.subr.mxu0 0.0
    %681 = vmatpush2.msra.mxu0 0.0
    %682 = vmatprep.mubr.f32.mxu0 0.0
    %683 = vmatmul.mubr.f32.gmra.mxu0 %v523
    %v684 = vpop.f32.mrf.mxu0
    %v685 = vadd.f32 %v347, %v684
    %v686 = vpop.f32.mrf.mxu0
    %687 = vdwg.mxu0
    %v688 = vsel %vm419, %v517, 0
    %690 = vmatprep.subr.mxu0 0.0
    %691 = vmatpush1.msra.mxu0 0.0
    %692 = vmatprep.subr.mxu0 0.0
    %693 = vmatpush1.msra.mxu0 0.0
    %694 = vmatprep.subr.mxu0 0.0
    %695 = vmatpush1.msra.mxu0 0.0
    %696 = vmatprep.subr.mxu0 0.0
    %697 = vmatpush1.msra.mxu0 0.0
    %698 = vmatprep.subr.mxu0 0.0
    %699 = vmatpush1.msra.mxu0 0.0
    %700 = vmatprep.subr.mxu0 0.0
    %701 = vmatpush1.msra.mxu0 0.0
    %702 = vmatprep.subr.mxu0 0.0
    %703 = vmatpush1.msra.mxu0 0.0
    %704 = vmatprep.subr.mxu0 0.0
    %705 = vmatpush1.msra.mxu0 0.0
    %706 = vmatprep.subr.mxu0 0.0
    %707 = vmatpush1.msra.mxu0 0.0
    %708 = vmatprep.subr.mxu0 0.0
    %709 = vmatpush1.msra.mxu0 0.0
    %710 = vmatprep.subr.mxu0 0.0
    %711 = vmatpush1.msra.mxu0 0.0
    %712 = vmatprep.subr.mxu0 0.0
    %713 = vmatpush1.msra.mxu0 0.0
    %714 = vmatprep.subr.mxu0 0.0
    %715 = vmatpush1.msra.mxu0 0.0
    %716 = vmatprep.subr.mxu0 0.0
    %717 = vmatpush1.msra.mxu0 0.0
    %718 = vmatprep.subr.mxu0 0.0
    %719 = vmatpush1.msra.mxu0 %v63
    %720 = vmatprep.subr.mxu0 0.0
    %721 = vmatpush1.msra.mxu0 %v62
    %722 = vmatprep.subr.mxu0 0.0
    %723 = vmatpush2.msra.mxu0 0.0
    %724 = vmatprep.subr.mxu0 0.0
    %725 = vmatpush2.msra.mxu0 0.0
    %726 = vmatprep.subr.mxu0 0.0
    %727 = vmatpush2.msra.mxu0 0.0
    %728 = vmatprep.subr.mxu0 0.0
    %729 = vmatpush2.msra.mxu0 0.0
    %730 = vmatprep.subr.mxu0 0.0
    %731 = vmatpush2.msra.mxu0 0.0
    %732 = vmatprep.subr.mxu0 0.0
    %733 = vmatpush2.msra.mxu0 0.0
    %734 = vmatprep.subr.mxu0 0.0
    %735 = vmatpush2.msra.mxu0 0.0
    %736 = vmatprep.subr.mxu0 0.0
    %737 = vmatpush2.msra.mxu0 0.0
    %738 = vmatprep.subr.mxu0 0.0
    %739 = vmatpush2.msra.mxu0 0.0
    %740 = vmatprep.subr.mxu0 0.0
    %741 = vmatpush2.msra.mxu0 0.0
    %742 = vmatprep.subr.mxu0 0.0
    %743 = vmatpush2.msra.mxu0 0.0
    %744 = vmatprep.subr.mxu0 0.0
    %745 = vmatpush2.msra.mxu0 0.0
    %746 = vmatprep.subr.mxu0 0.0
    %747 = vmatpush2.msra.mxu0 0.0
    %748 = vmatprep.subr.mxu0 0.0
    %749 = vmatpush2.msra.mxu0 0.0
    %750 = vmatprep.subr.mxu0 0.0
    %751 = vmatpush2.msra.mxu0 0.0
    %752 = vmatprep.subr.mxu0 0.0
    %753 = vmatpush2.msra.mxu0 0.0
    %754 = vmatprep.mubr.f32.mxu0 0.0
    %755 = vmatmul.mubr.f32.gmra.mxu0 %v688
    %v756 = vpop.f32.mrf.mxu0
    %v757 = vadd.f32 0.0, %v756
    %v758 = vpop.f32.mrf.mxu0
    %759 = vdwg.mxu0
    %v760 = vadd.f32 %v685, %v757
    %v761 = vmul.f32 %v760, 0.5
    %v762 = vtanh.pop %v761
    %v763 = vmul.f32 %v762, 0.5
    %v764 = vadd.f32 %v763, 0.5
    %v765 = vtanh.pop %v760
    %v766 = vmul.f32 %v764, %v508
    %768 = vrot.lane.b32.xlu0 %v765, 96
    %v769 = vpop.permute.xlu0 %768
    %v771 = vmul.f32 %v764, %v769
    %773 = vrot.lane.b32.xlu0 %v771, 16
    %v774 = vpop.permute.xlu0 %773
    %v776 = vadd.f32 %v766, %v774
    %v777 = vtanh.pop %v776
    %779 = vrot.lane.b32.xlu0 %v777, 32
    %v780 = vpop.permute.xlu0 %779
    %v782 = vmul.f32 %v764, %v780
    %784 = vrot.lane.b32.xlu0 %v782, 80
    %v785 = vpop.permute.xlu0 %784
    %787 = vst.msk [vmem:[%s7 + $0x8] sm:$0xff] %vm419, %v785
    %789 = vrot.lane.b32.xlu0 %v617, 32
    %v790 = vpop.permute.xlu0 %789
    %v791 = vsel %vm148, %v790, 0
    %793 = vmatprep.subr.mxu0 0.0
    %794 = vmatpush1.msra.mxu0 0.0
    %795 = vmatprep.subr.mxu0 0.0
    %796 = vmatpush1.msra.mxu0 0.0
    %797 = vmatprep.subr.mxu0 0.0
    %798 = vmatpush1.msra.mxu0 0.0
    %799 = vmatprep.subr.mxu0 0.0
    %800 = vmatpush1.msra.mxu0 0.0
    %801 = vmatprep.subr.mxu0 0.0
    %802 = vmatpush1.msra.mxu0 0.0
    %803 = vmatprep.subr.mxu0 0.0
    %804 = vmatpush1.msra.mxu0 0.0
    %805 = vmatprep.subr.mxu0 0.0
    %806 = vmatpush1.msra.mxu0 0.0
    %807 = vmatprep.subr.mxu0 0.0
    %808 = vmatpush1.msra.mxu0 0.0
    %809 = vmatprep.subr.mxu0 0.0
    %810 = vmatpush1.msra.mxu0 0.0
    %811 = vmatprep.subr.mxu0 0.0
    %812 = vmatpush1.msra.mxu0 0.0
    %813 = vmatprep.subr.mxu0 0.0
    %814 = vmatpush1.msra.mxu0 0.0
    %815 = vmatprep.subr.mxu0 0.0
    %816 = vmatpush1.msra.mxu0 0.0
    %817 = vmatprep.subr.mxu0 0.0
    %818 = vmatpush1.msra.mxu0 %v57
    %819 = vmatprep.subr.mxu0 0.0
    %820 = vmatpush1.msra.mxu0 %v56
    %821 = vmatprep.subr.mxu0 0.0
    %822 = vmatpush1.msra.mxu0 %v55
    %823 = vmatprep.subr.mxu0 0.0
    %824 = vmatpush1.msra.mxu0 %v54
    %825 = vmatprep.subr.mxu0 0.0
    %826 = vmatpush2.msra.mxu0 0.0
    %827 = vmatprep.subr.mxu0 0.0
    %828 = vmatpush2.msra.mxu0 0.0
    %829 = vmatprep.subr.mxu0 0.0
    %830 = vmatpush2.msra.mxu0 0.0
    %831 = vmatprep.subr.mxu0 0.0
    %832 = vmatpush2.msra.mxu0 0.0
    %833 = vmatprep.subr.mxu0 0.0
    %834 = vmatpush2.msra.mxu0 0.0
    %835 = vmatprep.subr.mxu0 0.0
    %836 = vmatpush2.msra.mxu0 0.0
    %837 = vmatprep.subr.mxu0 0.0
    %838 = vmatpush2.msra.mxu0 0.0
    %839 = vmatprep.subr.mxu0 0.0
    %840 = vmatpush2.msra.mxu0 0.0
    %841 = vmatprep.subr.mxu0 0.0
    %842 = vmatpush2.msra.mxu0 0.0
    %843 = vmatprep.subr.mxu0 0.0
    %844 = vmatpush2.msra.mxu0 0.0
    %845 = vmatprep.subr.mxu0 0.0
    %846 = vmatpush2.msra.mxu0 0.0
    %847 = vmatprep.subr.mxu0 0.0
    %848 = vmatpush2.msra.mxu0 0.0
    %849 = vmatprep.subr.mxu0 0.0
    %850 = vmatpush2.msra.mxu0 0.0
    %851 = vmatprep.subr.mxu0 0.0
    %852 = vmatpush2.msra.mxu0 0.0
    %853 = vmatprep.subr.mxu0 0.0
    %854 = vmatpush2.msra.mxu0 0.0
    %855 = vmatprep.subr.mxu0 0.0
    %856 = vmatpush2.msra.mxu0 0.0
    %857 = vmatprep.mubr.f32.mxu0 0.0
    %858 = vmatmul.mubr.f32.gmra.mxu0 %v791
    %v859 = vpop.f32.mrf.mxu0
    %v860 = vadd.f32 0.0, %v859
    %v861 = vpop.f32.mrf.mxu0
    %862 = vdwg.mxu0
    %v863 = vadd.f32 %v145, %v860
    %v864 = vmul.f32 %v863, 0.5
    %v865 = vtanh.pop %v864
    %v866 = vmul.f32 %v865, 0.5
    %v867 = vadd.f32 %v866, 0.5
    %v868 = vtanh.pop %v863
    %v869 = vmul.f32 %v867, %v611
    %871 = vrot.lane.b32.xlu0 %v868, 64
    %v872 = vpop.permute.xlu0 %871
    %v874 = vmul.f32 %v867, %v872
    %876 = vrot.lane.b32.xlu0 %v874, 32
    %v877 = vpop.permute.xlu0 %876
    %v879 = vadd.f32 %v869, %v877
    %v880 = vtanh.pop %v879
    %882 = vrot.lane.b32.xlu0 %v880, 64
    %v883 = vpop.permute.xlu0 %882
    %v885 = vmul.f32 %v867, %v883
    %886 = vmatprep.subr.mxu0 0.0
    %887 = vmatpush1.msra.mxu0 0.0
    %888 = vmatprep.subr.mxu0 0.0
    %889 = vmatpush1.msra.mxu0 0.0
    %890 = vmatprep.subr.mxu0 0.0
    %891 = vmatpush1.msra.mxu0 0.0
    %892 = vmatprep.subr.mxu0 0.0
    %893 = vmatpush1.msra.mxu0 0.0
    %894 = vmatprep.subr.mxu0 0.0
    %895 = vmatpush1.msra.mxu0 0.0
    %896 = vmatprep.subr.mxu0 0.0
    %897 = vmatpush1.msra.mxu0 0.0
    %898 = vmatprep.subr.mxu0 0.0
    %899 = vmatpush1.msra.mxu0 0.0
    %900 = vmatprep.subr.mxu0 0.0
    %901 = vmatpush1.msra.mxu0 0.0
    %902 = vmatprep.subr.mxu0 0.0
    %903 = vmatpush1.msra.mxu0 0.0
    %904 = vmatprep.subr.mxu0 0.0
    %905 = vmatpush1.msra.mxu0 0.0
    %906 = vmatprep.subr.mxu0 0.0
    %907 = vmatpush1.msra.mxu0 0.0
    %908 = vmatprep.subr.mxu0 0.0
    %909 = vmatpush1.msra.mxu0 0.0
    %910 = vmatprep.subr.mxu0 0.0
    %911 = vmatpush1.msra.mxu0 %v61
    %912 = vmatprep.subr.mxu0 0.0
    %913 = vmatpush1.msra.mxu0 %v60
    %914 = vmatprep.subr.mxu0 0.0
    %915 = vmatpush1.msra.mxu0 %v59
    %916 = vmatprep.subr.mxu0 0.0
    %917 = vmatpush1.msra.mxu0 %v58
    %918 = vmatprep.subr.mxu0 0.0
    %919 = vmatpush2.msra.mxu0 0.0
    %920 = vmatprep.subr.mxu0 0.0
    %921 = vmatpush2.msra.mxu0 0.0
    %922 = vmatprep.subr.mxu0 0.0
    %923 = vmatpush2.msra.mxu0 0.0
    %924 = vmatprep.subr.mxu0 0.0
    %925 = vmatpush2.msra.mxu0 0.0
    %926 = vmatprep.subr.mxu0 0.0
    %927 = vmatpush2.msra.mxu0 0.0
    %928 = vmatprep.subr.mxu0 0.0
    %929 = vmatpush2.msra.mxu0 0.0
    %930 = vmatprep.subr.mxu0 0.0
    %931 = vmatpush2.msra.mxu0 0.0
    %932 = vmatprep.subr.mxu0 0.0
    %933 = vmatpush2.msra.mxu0 0.0
    %934 = vmatprep.subr.mxu0 0.0
    %935 = vmatpush2.msra.mxu0 0.0
    %936 = vmatprep.subr.mxu0 0.0
    %937 = vmatpush2.msra.mxu0 0.0
    %938 = vmatprep.subr.mxu0 0.0
    %939 = vmatpush2.msra.mxu0 0.0
    %940 = vmatprep.subr.mxu0 0.0
    %941 = vmatpush2.msra.mxu0 0.0
    %942 = vmatprep.subr.mxu0 0.0
    %943 = vmatpush2.msra.mxu0 0.0
    %944 = vmatprep.subr.mxu0 0.0
    %945 = vmatpush2.msra.mxu0 0.0
    %946 = vmatprep.subr.mxu0 0.0
    %947 = vmatpush2.msra.mxu0 0.0
    %948 = vmatprep.subr.mxu0 0.0
    %949 = vmatpush2.msra.mxu0 0.0
    %950 = vmatprep.mubr.f32.mxu0 0.0
    %951 = vmatmul.mubr.f32.gmra.mxu0 %v791
    %v952 = vpop.f32.mrf.mxu0
    %v953 = vadd.f32 %v347, %v952
    %v954 = vpop.f32.mrf.mxu0
    %955 = vdwg.mxu0
    %v956 = vsel %vm419, %v785, 0
    %958 = vmatprep.subr.mxu0 0.0
    %959 = vmatpush1.msra.mxu0 0.0
    %960 = vmatprep.subr.mxu0 0.0
    %961 = vmatpush1.msra.mxu0 0.0
    %962 = vmatprep.subr.mxu0 0.0
    %963 = vmatpush1.msra.mxu0 0.0
    %964 = vmatprep.subr.mxu0 0.0
    %965 = vmatpush1.msra.mxu0 0.0
    %966 = vmatprep.subr.mxu0 0.0
    %967 = vmatpush1.msra.mxu0 0.0
    %968 = vmatprep.subr.mxu0 0.0
    %969 = vmatpush1.msra.mxu0 0.0
    %970 = vmatprep.subr.mxu0 0.0
    %971 = vmatpush1.msra.mxu0 0.0
    %972 = vmatprep.subr.mxu0 0.0
    %973 = vmatpush1.msra.mxu0 0.0
    %974 = vmatprep.subr.mxu0 0.0
    %975 = vmatpush1.msra.mxu0 0.0
    %976 = vmatprep.subr.mxu0 0.0
    %977 = vmatpush1.msra.mxu0 0.0
    %978 = vmatprep.subr.mxu0 0.0
    %979 = vmatpush1.msra.mxu0 0.0
    %980 = vmatprep.subr.mxu0 0.0
    %981 = vmatpush1.msra.mxu0 0.0
    %982 = vmatprep.subr.mxu0 0.0
    %983 = vmatpush1.msra.mxu0 0.0
    %984 = vmatprep.subr.mxu0 0.0
    %985 = vmatpush1.msra.mxu0 0.0
    %986 = vmatprep.subr.mxu0 0.0
    %987 = vmatpush1.msra.mxu0 %v63
    %988 = vmatprep.subr.mxu0 0.0
    %989 = vmatpush1.msra.mxu0 %v62
    %990 = vmatprep.subr.mxu0 0.0
    %991 = vmatpush2.msra.mxu0 0.0
    %992 = vmatprep.subr.mxu0 0.0
    %993 = vmatpush2.msra.mxu0 0.0
    %994 = vmatprep.subr.mxu0 0.0
    %995 = vmatpush2.msra.mxu0 0.0
    %996 = vmatprep.subr.mxu0 0.0
    %997 = vmatpush2.msra.mxu0 0.0
    %998 = vmatprep.subr.mxu0 0.0
    %999 = vmatpush2.msra.mxu0 0.0
    %1000 = vmatprep.subr.mxu0 0.0
    %1001 = vmatpush2.msra.mxu0 0.0
    %1002 = vmatprep.subr.mxu0 0.0
    %1003 = vmatpush2.msra.mxu0 0.0
    %1004 = vmatprep.subr.mxu0 0.0
    %1005 = vmatpush2.msra.mxu0 0.0
    %1006 = vmatprep.subr.mxu0 0.0
    %1007 = vmatpush2.msra.mxu0 0.0
    %1008 = vmatprep.subr.mxu0 0.0
    %1009 = vmatpush2.msra.mxu0 0.0
    %1010 = vmatprep.subr.mxu0 0.0
    %1011 = vmatpush2.msra.mxu0 0.0
    %1012 = vmatprep.subr.mxu0 0.0
    %1013 = vmatpush2.msra.mxu0 0.0
    %1014 = vmatprep.subr.mxu0 0.0
    %1015 = vmatpush2.msra.mxu0 0.0
    %1016 = vmatprep.subr.mxu0 0.0
    %1017 = vmatpush2.msra.mxu0 0.0
    %1018 = vmatprep.subr.mxu0 0.0
    %1019 = vmatpush2.msra.mxu0 0.0
    %1020 = vmatprep.subr.mxu0 0.0
    %1021 = vmatpush2.msra.mxu0 0.0
    %1022 = vmatprep.mubr.f32.mxu0 0.0
    %1023 = vmatmul.mubr.f32.gmra.mxu0 %v956
    %v1024 = vpop.f32.mrf.mxu0
    %v1025 = vadd.f32 0.0, %v1024
    %v1026 = vpop.f32.mrf.mxu0
    %1027 = vdwg.mxu0
    %v1028 = vadd.f32 %v953, %v1025
    %v1029 = vmul.f32 %v1028, 0.5
    %v1030 = vtanh.pop %v1029
    %v1031 = vmul.f32 %v1030, 0.5
    %v1032 = vadd.f32 %v1031, 0.5
    %v1033 = vtanh.pop %v1028
    %v1034 = vmul.f32 %v1032, %v776
    %1036 = vrot.lane.b32.xlu0 %v1033, 96
    %v1037 = vpop.permute.xlu0 %1036
    %v1039 = vmul.f32 %v1032, %v1037
    %1041 = vrot.lane.b32.xlu0 %v1039, 16
    %v1042 = vpop.permute.xlu0 %1041
    %v1044 = vadd.f32 %v1034, %v1042
    %v1045 = vtanh.pop %v1044
    %1047 = vrot.lane.b32.xlu0 %v1045, 32
    %v1048 = vpop.permute.xlu0 %1047
    %v1050 = vmul.f32 %v1032, %v1048
    %1052 = vrot.lane.b32.xlu0 %v1050, 80
    %v1053 = vpop.permute.xlu0 %1052
    %1055 = vst.msk [vmem:[%s7 + $0x10] sm:$0xff] %vm419, %v1053
    %1057 = vrot.lane.b32.xlu0 %v885, 32
    %v1058 = vpop.permute.xlu0 %1057
    %v1059 = vsel %vm148, %v1058, 0
    %1061 = vmatprep.subr.mxu0 0.0
    %1062 = vmatpush1.msra.mxu0 0.0
    %1063 = vmatprep.subr.mxu0 0.0
    %1064 = vmatpush1.msra.mxu0 0.0
    %1065 = vmatprep.subr.mxu0 0.0
    %1066 = vmatpush1.msra.mxu0 0.0
    %1067 = vmatprep.subr.mxu0 0.0
    %1068 = vmatpush1.msra.mxu0 0.0
    %1069 = vmatprep.subr.mxu0 0.0
    %1070 = vmatpush1.msra.mxu0 0.0
    %1071 = vmatprep.subr.mxu0 0.0
    %1072 = vmatpush1.msra.mxu0 0.0
    %1073 = vmatprep.subr.mxu0 0.0
    %1074 = vmatpush1.msra.mxu0 0.0
    %1075 = vmatprep.subr.mxu0 0.0
    %1076 = vmatpush1.msra.mxu0 0.0
    %1077 = vmatprep.subr.mxu0 0.0
    %1078 = vmatpush1.msra.mxu0 0.0
    %1079 = vmatprep.subr.mxu0 0.0
    %1080 = vmatpush1.msra.mxu0 0.0
    %1081 = vmatprep.subr.mxu0 0.0
    %1082 = vmatpush1.msra.mxu0 0.0
    %1083 = vmatprep.subr.mxu0 0.0
    %1084 = vmatpush1.msra.mxu0 0.0
    %1085 = vmatprep.subr.mxu0 0.0
    %1086 = vmatpush1.msra.mxu0 %v57
    %1087 = vmatprep.subr.mxu0 0.0
    %1088 = vmatpush1.msra.mxu0 %v56
    %1089 = vmatprep.subr.mxu0 0.0
    %1090 = vmatpush1.msra.mxu0 %v55
    %1091 = vmatprep.subr.mxu0 0.0
    %1092 = vmatpush1.msra.mxu0 %v54
    %1093 = vmatprep.subr.mxu0 0.0
    %1094 = vmatpush2.msra.mxu0 0.0
    %1095 = vmatprep.subr.mxu0 0.0
    %1096 = vmatpush2.msra.mxu0 0.0
    %1097 = vmatprep.subr.mxu0 0.0
    %1098 = vmatpush2.msra.mxu0 0.0
    %1099 = vmatprep.subr.mxu0 0.0
    %1100 = vmatpush2.msra.mxu0 0.0
    %1101 = vmatprep.subr.mxu0 0.0
    %1102 = vmatpush2.msra.mxu0 0.0
    %1103 = vmatprep.subr.mxu0 0.0
    %1104 = vmatpush2.msra.mxu0 0.0
    %1105 = vmatprep.subr.mxu0 0.0
    %1106 = vmatpush2.msra.mxu0 0.0
    %1107 = vmatprep.subr.mxu0 0.0
    %1108 = vmatpush2.msra.mxu0 0.0
    %1109 = vmatprep.subr.mxu0 0.0
    %1110 = vmatpush2.msra.mxu0 0.0
    %1111 = vmatprep.subr.mxu0 0.0
    %1112 = vmatpush2.msra.mxu0 0.0
    %1113 = vmatprep.subr.mxu0 0.0
    %1114 = vmatpush2.msra.mxu0 0.0
    %1115 = vmatprep.subr.mxu0 0.0
    %1116 = vmatpush2.msra.mxu0 0.0
    %1117 = vmatprep.subr.mxu0 0.0
    %1118 = vmatpush2.msra.mxu0 0.0
    %1119 = vmatprep.subr.mxu0 0.0
    %1120 = vmatpush2.msra.mxu0 0.0
    %1121 = vmatprep.subr.mxu0 0.0
    %1122 = vmatpush2.msra.mxu0 0.0
    %1123 = vmatprep.subr.mxu0 0.0
    %1124 = vmatpush2.msra.mxu0 0.0
    %1125 = vmatprep.mubr.f32.mxu0 0.0
    %1126 = vmatmul.mubr.f32.gmra.mxu0 %v1059
    %v1127 = vpop.f32.mrf.mxu0
    %v1128 = vadd.f32 0.0, %v1127
    %v1129 = vpop.f32.mrf.mxu0
    %1130 = vdwg.mxu0
    %v1131 = vadd.f32 %v145, %v1128
    %v1132 = vmul.f32 %v1131, 0.5
    %v1133 = vtanh.pop %v1132
    %v1134 = vmul.f32 %v1133, 0.5
    %v1135 = vadd.f32 %v1134, 0.5
    %v1136 = vtanh.pop %v1131
    %v1137 = vmul.f32 %v1135, %v879
    %1139 = vrot.lane.b32.xlu0 %v1136, 64
    %v1140 = vpop.permute.xlu0 %1139
    %v1142 = vmul.f32 %v1135, %v1140
    %1144 = vrot.lane.b32.xlu0 %v1142, 32
    %v1145 = vpop.permute.xlu0 %1144
    %v1147 = vadd.f32 %v1137, %v1145
    %v1148 = vtanh.pop %v1147
    %1150 = vrot.lane.b32.xlu0 %v1148, 64
    %v1151 = vpop.permute.xlu0 %1150
    %v1153 = vmul.f32 %v1135, %v1151
    %1154 = vmatprep.subr.mxu0 0.0
    %1155 = vmatpush1.msra.mxu0 0.0
    %1156 = vmatprep.subr.mxu0 0.0
    %1157 = vmatpush1.msra.mxu0 0.0
    %1158 = vmatprep.subr.mxu0 0.0
    %1159 = vmatpush1.msra.mxu0 0.0
    %1160 = vmatprep.subr.mxu0 0.0
    %1161 = vmatpush1.msra.mxu0 0.0
    %1162 = vmatprep.subr.mxu0 0.0
    %1163 = vmatpush1.msra.mxu0 0.0
    %1164 = vmatprep.subr.mxu0 0.0
    %1165 = vmatpush1.msra.mxu0 0.0
    %1166 = vmatprep.subr.mxu0 0.0
    %1167 = vmatpush1.msra.mxu0 0.0
    %1168 = vmatprep.subr.mxu0 0.0
    %1169 = vmatpush1.msra.mxu0 0.0
    %1170 = vmatprep.subr.mxu0 0.0
    %1171 = vmatpush1.msra.mxu0 0.0
    %1172 = vmatprep.subr.mxu0 0.0
    %1173 = vmatpush1.msra.mxu0 0.0
    %1174 = vmatprep.subr.mxu0 0.0
    %1175 = vmatpush1.msra.mxu0 0.0
    %1176 = vmatprep.subr.mxu0 0.0
    %1177 = vmatpush1.msra.mxu0 0.0
    %1178 = vmatprep.subr.mxu0 0.0
    %1179 = vmatpush1.msra.mxu0 %v61
    %1180 = vmatprep.subr.mxu0 0.0
    %1181 = vmatpush1.msra.mxu0 %v60
    %1182 = vmatprep.subr.mxu0 0.0
    %1183 = vmatpush1.msra.mxu0 %v59
    %1184 = vmatprep.subr.mxu0 0.0
    %1185 = vmatpush1.msra.mxu0 %v58
    %1186 = vmatprep.subr.mxu0 0.0
    %1187 = vmatpush2.msra.mxu0 0.0
    %1188 = vmatprep.subr.mxu0 0.0
    %1189 = vmatpush2.msra.mxu0 0.0
    %1190 = vmatprep.subr.mxu0 0.0
    %1191 = vmatpush2.msra.mxu0 0.0
    %1192 = vmatprep.subr.mxu0 0.0
    %1193 = vmatpush2.msra.mxu0 0.0
    %1194 = vmatprep.subr.mxu0 0.0
    %1195 = vmatpush2.msra.mxu0 0.0
    %1196 = vmatprep.subr.mxu0 0.0
    %1197 = vmatpush2.msra.mxu0 0.0
    %1198 = vmatprep.subr.mxu0 0.0
    %1199 = vmatpush2.msra.mxu0 0.0
    %1200 = vmatprep.subr.mxu0 0.0
    %1201 = vmatpush2.msra.mxu0 0.0
    %1202 = vmatprep.subr.mxu0 0.0
    %1203 = vmatpush2.msra.mxu0 0.0
    %1204 = vmatprep.subr.mxu0 0.0
    %1205 = vmatpush2.msra.mxu0 0.0
    %1206 = vmatprep.subr.mxu0 0.0
    %1207 = vmatpush2.msra.mxu0 0.0
    %1208 = vmatprep.subr.mxu0 0.0
    %1209 = vmatpush2.msra.mxu0 0.0
    %1210 = vmatprep.subr.mxu0 0.0
    %1211 = vmatpush2.msra.mxu0 0.0
    %1212 = vmatprep.subr.mxu0 0.0
    %1213 = vmatpush2.msra.mxu0 0.0
    %1214 = vmatprep.subr.mxu0 0.0
    %1215 = vmatpush2.msra.mxu0 0.0
    %1216 = vmatprep.subr.mxu0 0.0
    %1217 = vmatpush2.msra.mxu0 0.0
    %1218 = vmatprep.mubr.f32.mxu0 0.0
    %1219 = vmatmul.mubr.f32.gmra.mxu0 %v1059
    %v1220 = vpop.f32.mrf.mxu0
    %v1221 = vadd.f32 %v347, %v1220
    %v1222 = vpop.f32.mrf.mxu0
    %1223 = vdwg.mxu0
    %v1224 = vsel %vm419, %v1053, 0
    %1226 = vmatprep.subr.mxu0 0.0
    %1227 = vmatpush1.msra.mxu0 0.0
    %1228 = vmatprep.subr.mxu0 0.0
    %1229 = vmatpush1.msra.mxu0 0.0
    %1230 = vmatprep.subr.mxu0 0.0
    %1231 = vmatpush1.msra.mxu0 0.0
    %1232 = vmatprep.subr.mxu0 0.0
    %1233 = vmatpush1.msra.mxu0 0.0
    %1234 = vmatprep.subr.mxu0 0.0
    %1235 = vmatpush1.msra.mxu0 0.0
    %1236 = vmatprep.subr.mxu0 0.0
    %1237 = vmatpush1.msra.mxu0 0.0
    %1238 = vmatprep.subr.mxu0 0.0
    %1239 = vmatpush1.msra.mxu0 0.0
    %1240 = vmatprep.subr.mxu0 0.0
    %1241 = vmatpush1.msra.mxu0 0.0
    %1242 = vmatprep.subr.mxu0 0.0
    %1243 = vmatpush1.msra.mxu0 0.0
    %1244 = vmatprep.subr.mxu0 0.0
    %1245 = vmatpush1.msra.mxu0 0.0
    %1246 = vmatprep.subr.mxu0 0.0
    %1247 = vmatpush1.msra.mxu0 0.0
    %1248 = vmatprep.subr.mxu0 0.0
    %1249 = vmatpush1.msra.mxu0 0.0
    %1250 = vmatprep.subr.mxu0 0.0
    %1251 = vmatpush1.msra.mxu0 0.0
    %1252 = vmatprep.subr.mxu0 0.0
    %1253 = vmatpush1.msra.mxu0 0.0
    %1254 = vmatprep.subr.mxu0 0.0
    %1255 = vmatpush1.msra.mxu0 %v63
    %1256 = vmatprep.subr.mxu0 0.0
    %1257 = vmatpush1.msra.mxu0 %v62
    %1258 = vmatprep.subr.mxu0 0.0
    %1259 = vmatpush2.msra.mxu0 0.0
    %1260 = vmatprep.subr.mxu0 0.0
    %1261 = vmatpush2.msra.mxu0 0.0
    %1262 = vmatprep.subr.mxu0 0.0
    %1263 = vmatpush2.msra.mxu0 0.0
    %1264 = vmatprep.subr.mxu0 0.0
    %1265 = vmatpush2.msra.mxu0 0.0
    %1266 = vmatprep.subr.mxu0 0.0
    %1267 = vmatpush2.msra.mxu0 0.0
    %1268 = vmatprep.subr.mxu0 0.0
    %1269 = vmatpush2.msra.mxu0 0.0
    %1270 = vmatprep.subr.mxu0 0.0
    %1271 = vmatpush2.msra.mxu0 0.0
    %1272 = vmatprep.subr.mxu0 0.0
    %1273 = vmatpush2.msra.mxu0 0.0
    %1274 = vmatprep.subr.mxu0 0.0
    %1275 = vmatpush2.msra.mxu0 0.0
    %1276 = vmatprep.subr.mxu0 0.0
    %1277 = vmatpush2.msra.mxu0 0.0
    %1278 = vmatprep.subr.mxu0 0.0
    %1279 = vmatpush2.msra.mxu0 0.0
    %1280 = vmatprep.subr.mxu0 0.0
    %1281 = vmatpush2.msra.mxu0 0.0
    %1282 = vmatprep.subr.mxu0 0.0
    %1283 = vmatpush2.msra.mxu0 0.0
    %1284 = vmatprep.subr.mxu0 0.0
    %1285 = vmatpush2.msra.mxu0 0.0
    %1286 = vmatprep.subr.mxu0 0.0
    %1287 = vmatpush2.msra.mxu0 0.0
    %1288 = vmatprep.subr.mxu0 0.0
    %1289 = vmatpush2.msra.mxu0 0.0
    %1290 = vmatprep.mubr.f32.mxu0 0.0
    %1291 = vmatmul.mubr.f32.gmra.mxu0 %v1224
    %v1292 = vpop.f32.mrf.mxu0
    %v1293 = vadd.f32 0.0, %v1292
    %v1294 = vpop.f32.mrf.mxu0
    %1295 = vdwg.mxu0
    %v1296 = vadd.f32 %v1221, %v1293
    %v1297 = vmul.f32 %v1296, 0.5
    %v1298 = vtanh.pop %v1297
    %v1299 = vmul.f32 %v1298, 0.5
    %v1300 = vadd.f32 %v1299, 0.5
    %v1301 = vtanh.pop %v1296
    %v1302 = vmul.f32 %v1300, %v1044
    %1304 = vrot.lane.b32.xlu0 %v1301, 96
    %v1305 = vpop.permute.xlu0 %1304
    %v1307 = vmul.f32 %v1300, %v1305
    %1309 = vrot.lane.b32.xlu0 %v1307, 16
    %v1310 = vpop.permute.xlu0 %1309
    %v1312 = vadd.f32 %v1302, %v1310
    %v1313 = vtanh.pop %v1312
    %1315 = vrot.lane.b32.xlu0 %v1313, 32
    %v1316 = vpop.permute.xlu0 %1315
    %v1318 = vmul.f32 %v1300, %v1316
    %1320 = vrot.lane.b32.xlu0 %v1318, 80
    %v1321 = vpop.permute.xlu0 %1320
    %1323 = vst.msk [vmem:[%s7 + $0x18] sm:$0xff] %vm419, %v1321
    %1325 = vrot.lane.b32.xlu0 %v1153, 32
    %v1326 = vpop.permute.xlu0 %1325
    %v1327 = vsel %vm148, %v1326, 0
    %1329 = vmatprep.subr.mxu0 0.0
    %1330 = vmatpush1.msra.mxu0 0.0
    %1331 = vmatprep.subr.mxu0 0.0
    %1332 = vmatpush1.msra.mxu0 0.0
    %1333 = vmatprep.subr.mxu0 0.0
    %1334 = vmatpush1.msra.mxu0 0.0
    %1335 = vmatprep.subr.mxu0 0.0
    %1336 = vmatpush1.msra.mxu0 0.0
    %1337 = vmatprep.subr.mxu0 0.0
    %1338 = vmatpush1.msra.mxu0 0.0
    %1339 = vmatprep.subr.mxu0 0.0
    %1340 = vmatpush1.msra.mxu0 0.0
    %1341 = vmatprep.subr.mxu0 0.0
    %1342 = vmatpush1.msra.mxu0 0.0
    %1343 = vmatprep.subr.mxu0 0.0
    %1344 = vmatpush1.msra.mxu0 0.0
    %1345 = vmatprep.subr.mxu0 0.0
    %1346 = vmatpush1.msra.mxu0 0.0
    %1347 = vmatprep.subr.mxu0 0.0
    %1348 = vmatpush1.msra.mxu0 0.0
    %1349 = vmatprep.subr.mxu0 0.0
    %1350 = vmatpush1.msra.mxu0 0.0
    %1351 = vmatprep.subr.mxu0 0.0
    %1352 = vmatpush1.msra.mxu0 0.0
    %1353 = vmatprep.subr.mxu0 0.0
    %1354 = vmatpush1.msra.mxu0 %v57
    %1355 = vmatprep.subr.mxu0 0.0
    %1356 = vmatpush1.msra.mxu0 %v56
    %1357 = vmatprep.subr.mxu0 0.0
    %1358 = vmatpush1.msra.mxu0 %v55
    %1359 = vmatprep.subr.mxu0 0.0
    %1360 = vmatpush1.msra.mxu0 %v54
    %1361 = vmatprep.subr.mxu0 0.0
    %1362 = vmatpush2.msra.mxu0 0.0
    %1363 = vmatprep.subr.mxu0 0.0
    %1364 = vmatpush2.msra.mxu0 0.0
    %1365 = vmatprep.subr.mxu0 0.0
    %1366 = vmatpush2.msra.mxu0 0.0
    %1367 = vmatprep.subr.mxu0 0.0
    %1368 = vmatpush2.msra.mxu0 0.0
    %1369 = vmatprep.subr.mxu0 0.0
    %1370 = vmatpush2.msra.mxu0 0.0
    %1371 = vmatprep.subr.mxu0 0.0
    %1372 = vmatpush2.msra.mxu0 0.0
    %1373 = vmatprep.subr.mxu0 0.0
    %1374 = vmatpush2.msra.mxu0 0.0
    %1375 = vmatprep.subr.mxu0 0.0
    %1376 = vmatpush2.msra.mxu0 0.0
    %1377 = vmatprep.subr.mxu0 0.0
    %1378 = vmatpush2.msra.mxu0 0.0
    %1379 = vmatprep.subr.mxu0 0.0
    %1380 = vmatpush2.msra.mxu0 0.0
    %1381 = vmatprep.subr.mxu0 0.0
    %1382 = vmatpush2.msra.mxu0 0.0
    %1383 = vmatprep.subr.mxu0 0.0
    %1384 = vmatpush2.msra.mxu0 0.0
    %1385 = vmatprep.subr.mxu0 0.0
    %1386 = vmatpush2.msra.mxu0 0.0
    %1387 = vmatprep.subr.mxu0 0.0
    %1388 = vmatpush2.msra.mxu0 0.0
    %1389 = vmatprep.subr.mxu0 0.0
    %1390 = vmatpush2.msra.mxu0 0.0
    %1391 = vmatprep.subr.mxu0 0.0
    %1392 = vmatpush2.msra.mxu0 0.0
    %1393 = vmatprep.mubr.f32.mxu0 0.0
    %1394 = vmatmul.mubr.f32.gmra.mxu0 %v1327
    %v1395 = vpop.f32.mrf.mxu0
    %v1396 = vadd.f32 0.0, %v1395
    %v1397 = vpop.f32.mrf.mxu0
    %1398 = vdwg.mxu0
    %v1399 = vadd.f32 %v145, %v1396
    %v1400 = vmul.f32 %v1399, 0.5
    %v1401 = vtanh.pop %v1400
    %v1402 = vmul.f32 %v1401, 0.5
    %v1403 = vadd.f32 %v1402, 0.5
    %v1404 = vtanh.pop %v1399
    %v1405 = vmul.f32 %v1403, %v1147
    %1407 = vrot.lane.b32.xlu0 %v1404, 64
    %v1408 = vpop.permute.xlu0 %1407
    %v1410 = vmul.f32 %v1403, %v1408
    %1412 = vrot.lane.b32.xlu0 %v1410, 32
    %v1413 = vpop.permute.xlu0 %1412
    %v1415 = vadd.f32 %v1405, %v1413
    %v1416 = vtanh.pop %v1415
    %1418 = vrot.lane.b32.xlu0 %v1416, 64
    %v1419 = vpop.permute.xlu0 %1418
    %v1421 = vmul.f32 %v1403, %v1419
    %1422 = vmatprep.subr.mxu0 0.0
    %1423 = vmatpush1.msra.mxu0 0.0
    %1424 = vmatprep.subr.mxu0 0.0
    %1425 = vmatpush1.msra.mxu0 0.0
    %1426 = vmatprep.subr.mxu0 0.0
    %1427 = vmatpush1.msra.mxu0 0.0
    %1428 = vmatprep.subr.mxu0 0.0
    %1429 = vmatpush1.msra.mxu0 0.0
    %1430 = vmatprep.subr.mxu0 0.0
    %1431 = vmatpush1.msra.mxu0 0.0
    %1432 = vmatprep.subr.mxu0 0.0
    %1433 = vmatpush1.msra.mxu0 0.0
    %1434 = vmatprep.subr.mxu0 0.0
    %1435 = vmatpush1.msra.mxu0 0.0
    %1436 = vmatprep.subr.mxu0 0.0
    %1437 = vmatpush1.msra.mxu0 0.0
    %1438 = vmatprep.subr.mxu0 0.0
    %1439 = vmatpush1.msra.mxu0 0.0
    %1440 = vmatprep.subr.mxu0 0.0
    %1441 = vmatpush1.msra.mxu0 0.0
    %1442 = vmatprep.subr.mxu0 0.0
    %1443 = vmatpush1.msra.mxu0 0.0
    %1444 = vmatprep.subr.mxu0 0.0
    %1445 = vmatpush1.msra.mxu0 0.0
    %1446 = vmatprep.subr.mxu0 0.0
    %1447 = vmatpush1.msra.mxu0 %v61
    %1448 = vmatprep.subr.mxu0 0.0
    %1449 = vmatpush1.msra.mxu0 %v60
    %1450 = vmatprep.subr.mxu0 0.0
    %1451 = vmatpush1.msra.mxu0 %v59
    %1452 = vmatprep.subr.mxu0 0.0
    %1453 = vmatpush1.msra.mxu0 %v58
    %1454 = vmatprep.subr.mxu0 0.0
    %1455 = vmatpush2.msra.mxu0 0.0
    %1456 = vmatprep.subr.mxu0 0.0
    %1457 = vmatpush2.msra.mxu0 0.0
    %1458 = vmatprep.subr.mxu0 0.0
    %1459 = vmatpush2.msra.mxu0 0.0
    %1460 = vmatprep.subr.mxu0 0.0
    %1461 = vmatpush2.msra.mxu0 0.0
    %1462 = vmatprep.subr.mxu0 0.0
    %1463 = vmatpush2.msra.mxu0 0.0
    %1464 = vmatprep.subr.mxu0 0.0
    %1465 = vmatpush2.msra.mxu0 0.0
    %1466 = vmatprep.subr.mxu0 0.0
    %1467 = vmatpush2.msra.mxu0 0.0
    %1468 = vmatprep.subr.mxu0 0.0
    %1469 = vmatpush2.msra.mxu0 0.0
    %1470 = vmatprep.subr.mxu0 0.0
    %1471 = vmatpush2.msra.mxu0 0.0
    %1472 = vmatprep.subr.mxu0 0.0
    %1473 = vmatpush2.msra.mxu0 0.0
    %1474 = vmatprep.subr.mxu0 0.0
    %1475 = vmatpush2.msra.mxu0 0.0
    %1476 = vmatprep.subr.mxu0 0.0
    %1477 = vmatpush2.msra.mxu0 0.0
    %1478 = vmatprep.subr.mxu0 0.0
    %1479 = vmatpush2.msra.mxu0 0.0
    %1480 = vmatprep.subr.mxu0 0.0
    %1481 = vmatpush2.msra.mxu0 0.0
    %1482 = vmatprep.subr.mxu0 0.0
    %1483 = vmatpush2.msra.mxu0 0.0
    %1484 = vmatprep.subr.mxu0 0.0
    %1485 = vmatpush2.msra.mxu0 0.0
    %1486 = vmatprep.mubr.f32.mxu0 0.0
    %1487 = vmatmul.mubr.f32.gmra.mxu0 %v1327
    %v1488 = vpop.f32.mrf.mxu0
    %v1489 = vadd.f32 %v347, %v1488
    %v1490 = vpop.f32.mrf.mxu0
    %1491 = vdwg.mxu0
    %v1492 = vsel %vm419, %v1321, 0
    %1494 = vmatprep.subr.mxu0 0.0
    %1495 = vmatpush1.msra.mxu0 0.0
    %1496 = vmatprep.subr.mxu0 0.0
    %1497 = vmatpush1.msra.mxu0 0.0
    %1498 = vmatprep.subr.mxu0 0.0
    %1499 = vmatpush1.msra.mxu0 0.0
    %1500 = vmatprep.subr.mxu0 0.0
    %1501 = vmatpush1.msra.mxu0 0.0
    %1502 = vmatprep.subr.mxu0 0.0
    %1503 = vmatpush1.msra.mxu0 0.0
    %1504 = vmatprep.subr.mxu0 0.0
    %1505 = vmatpush1.msra.mxu0 0.0
    %1506 = vmatprep.subr.mxu0 0.0
    %1507 = vmatpush1.msra.mxu0 0.0
    %1508 = vmatprep.subr.mxu0 0.0
    %1509 = vmatpush1.msra.mxu0 0.0
    %1510 = vmatprep.subr.mxu0 0.0
    %1511 = vmatpush1.msra.mxu0 0.0
    %1512 = vmatprep.subr.mxu0 0.0
    %1513 = vmatpush1.msra.mxu0 0.0
    %1514 = vmatprep.subr.mxu0 0.0
    %1515 = vmatpush1.msra.mxu0 0.0
    %1516 = vmatprep.subr.mxu0 0.0
    %1517 = vmatpush1.msra.mxu0 0.0
    %1518 = vmatprep.subr.mxu0 0.0
    %1519 = vmatpush1.msra.mxu0 0.0
    %1520 = vmatprep.subr.mxu0 0.0
    %1521 = vmatpush1.msra.mxu0 0.0
    %1522 = vmatprep.subr.mxu0 0.0
    %1523 = vmatpush1.msra.mxu0 %v63
    %1524 = vmatprep.subr.mxu0 0.0
    %1525 = vmatpush1.msra.mxu0 %v62
    %1526 = vmatprep.subr.mxu0 0.0
    %1527 = vmatpush2.msra.mxu0 0.0
    %1528 = vmatprep.subr.mxu0 0.0
    %1529 = vmatpush2.msra.mxu0 0.0
    %1530 = vmatprep.subr.mxu0 0.0
    %1531 = vmatpush2.msra.mxu0 0.0
    %1532 = vmatprep.subr.mxu0 0.0
    %1533 = vmatpush2.msra.mxu0 0.0
    %1534 = vmatprep.subr.mxu0 0.0
    %1535 = vmatpush2.msra.mxu0 0.0
    %1536 = vmatprep.subr.mxu0 0.0
    %1537 = vmatpush2.msra.mxu0 0.0
    %1538 = vmatprep.subr.mxu0 0.0
    %1539 = vmatpush2.msra.mxu0 0.0
    %1540 = vmatprep.subr.mxu0 0.0
    %1541 = vmatpush2.msra.mxu0 0.0
    %1542 = vmatprep.subr.mxu0 0.0
    %1543 = vmatpush2.msra.mxu0 0.0
    %1544 = vmatprep.subr.mxu0 0.0
    %1545 = vmatpush2.msra.mxu0 0.0
    %1546 = vmatprep.subr.mxu0 0.0
    %1547 = vmatpush2.msra.mxu0 0.0
    %1548 = vmatprep.subr.mxu0 0.0
    %1549 = vmatpush2.msra.mxu0 0.0
    %1550 = vmatprep.subr.mxu0 0.0
    %1551 = vmatpush2.msra.mxu0 0.0
    %1552 = vmatprep.subr.mxu0 0.0
    %1553 = vmatpush2.msra.mxu0 0.0
    %1554 = vmatprep.subr.mxu0 0.0
    %1555 = vmatpush2.msra.mxu0 0.0
    %1556 = vmatprep.subr.mxu0 0.0
    %1557 = vmatpush2.msra.mxu0 0.0
    %1558 = vmatprep.mubr.f32.mxu0 0.0
    %1559 = vmatmul.mubr.f32.gmra.mxu0 %v1492
    %v1560 = vpop.f32.mrf.mxu0
    %v1561 = vadd.f32 0.0, %v1560
    %v1562 = vpop.f32.mrf.mxu0
    %1563 = vdwg.mxu0
    %v1564 = vadd.f32 %v1489, %v1561
    %v1565 = vmul.f32 %v1564, 0.5
    %v1566 = vtanh.pop %v1565
    %v1567 = vmul.f32 %v1566, 0.5
    %v1568 = vadd.f32 %v1567, 0.5
    %v1569 = vtanh.pop %v1564
    %v1570 = vmul.f32 %v1568, %v1312
    %1572 = vrot.lane.b32.xlu0 %v1569, 96
    %v1573 = vpop.permute.xlu0 %1572
    %v1575 = vmul.f32 %v1568, %v1573
    %1577 = vrot.lane.b32.xlu0 %v1575, 16
    %v1578 = vpop.permute.xlu0 %1577
    %v1580 = vadd.f32 %v1570, %v1578
    %v1581 = vtanh.pop %v1580
    %1583 = vrot.lane.b32.xlu0 %v1581, 32
    %v1584 = vpop.permute.xlu0 %1583
    %v1586 = vmul.f32 %v1568, %v1584
    %1588 = vrot.lane.b32.xlu0 %v1586, 80
    %v1589 = vpop.permute.xlu0 %1588
    %1591 = vst.msk [vmem:[%s7 + $0x20] sm:$0xff] %vm419, %v1589
    %1593 = vrot.lane.b32.xlu0 %v1421, 32
    %v1594 = vpop.permute.xlu0 %1593
    %v1595 = vsel %vm148, %v1594, 0
    %1597 = vmatprep.subr.mxu0 0.0
    %1598 = vmatpush1.msra.mxu0 0.0
    %1599 = vmatprep.subr.mxu0 0.0
    %1600 = vmatpush1.msra.mxu0 0.0
    %1601 = vmatprep.subr.mxu0 0.0
    %1602 = vmatpush1.msra.mxu0 0.0
    %1603 = vmatprep.subr.mxu0 0.0
    %1604 = vmatpush1.msra.mxu0 0.0
    %1605 = vmatprep.subr.mxu0 0.0
    %1606 = vmatpush1.msra.mxu0 0.0
    %1607 = vmatprep.subr.mxu0 0.0
    %1608 = vmatpush1.msra.mxu0 0.0
    %1609 = vmatprep.subr.mxu0 0.0
    %1610 = vmatpush1.msra.mxu0 0.0
    %1611 = vmatprep.subr.mxu0 0.0
    %1612 = vmatpush1.msra.mxu0 0.0
    %1613 = vmatprep.subr.mxu0 0.0
    %1614 = vmatpush1.msra.mxu0 0.0
    %1615 = vmatprep.subr.mxu0 0.0
    %1616 = vmatpush1.msra.mxu0 0.0
    %1617 = vmatprep.subr.mxu0 0.0
    %1618 = vmatpush1.msra.mxu0 0.0
    %1619 = vmatprep.subr.mxu0 0.0
    %1620 = vmatpush1.msra.mxu0 0.0
    %1621 = vmatprep.subr.mxu0 0.0
    %1622 = vmatpush1.msra.mxu0 %v57
    %1623 = vmatprep.subr.mxu0 0.0
    %1624 = vmatpush1.msra.mxu0 %v56
    %1625 = vmatprep.subr.mxu0 0.0
    %1626 = vmatpush1.msra.mxu0 %v55
    %1627 = vmatprep.subr.mxu0 0.0
    %1628 = vmatpush1.msra.mxu0 %v54
    %1629 = vmatprep.subr.mxu0 0.0
    %1630 = vmatpush2.msra.mxu0 0.0
    %1631 = vmatprep.subr.mxu0 0.0
    %1632 = vmatpush2.msra.mxu0 0.0
    %1633 = vmatprep.subr.mxu0 0.0
    %1634 = vmatpush2.msra.mxu0 0.0
    %1635 = vmatprep.subr.mxu0 0.0
    %1636 = vmatpush2.msra.mxu0 0.0
    %1637 = vmatprep.subr.mxu0 0.0
    %1638 = vmatpush2.msra.mxu0 0.0
    %1639 = vmatprep.subr.mxu0 0.0
    %1640 = vmatpush2.msra.mxu0 0.0
    %1641 = vmatprep.subr.mxu0 0.0
    %1642 = vmatpush2.msra.mxu0 0.0
    %1643 = vmatprep.subr.mxu0 0.0
    %1644 = vmatpush2.msra.mxu0 0.0
    %1645 = vmatprep.subr.mxu0 0.0
    %1646 = vmatpush2.msra.mxu0 0.0
    %1647 = vmatprep.subr.mxu0 0.0
    %1648 = vmatpush2.msra.mxu0 0.0
    %1649 = vmatprep.subr.mxu0 0.0
    %1650 = vmatpush2.msra.mxu0 0.0
    %1651 = vmatprep.subr.mxu0 0.0
    %1652 = vmatpush2.msra.mxu0 0.0
    %1653 = vmatprep.subr.mxu0 0.0
    %1654 = vmatpush2.msra.mxu0 0.0
    %1655 = vmatprep.subr.mxu0 0.0
    %1656 = vmatpush2.msra.mxu0 0.0
    %1657 = vmatprep.subr.mxu0 0.0
    %1658 = vmatpush2.msra.mxu0 0.0
    %1659 = vmatprep.subr.mxu0 0.0
    %1660 = vmatpush2.msra.mxu0 0.0
    %1661 = vmatprep.mubr.f32.mxu0 0.0
    %1662 = vmatmul.mubr.f32.gmra.mxu0 %v1595
    %v1663 = vpop.f32.mrf.mxu0
    %v1664 = vadd.f32 0.0, %v1663
    %v1665 = vpop.f32.mrf.mxu0
    %1666 = vdwg.mxu0
    %v1667 = vadd.f32 %v145, %v1664
    %v1668 = vmul.f32 %v1667, 0.5
    %v1669 = vtanh.pop %v1668
    %v1670 = vmul.f32 %v1669, 0.5
    %v1671 = vadd.f32 %v1670, 0.5
    %v1672 = vtanh.pop %v1667
    %v1673 = vmul.f32 %v1671, %v1415
    %1675 = vrot.lane.b32.xlu0 %v1672, 64
    %v1676 = vpop.permute.xlu0 %1675
    %v1678 = vmul.f32 %v1671, %v1676
    %1680 = vrot.lane.b32.xlu0 %v1678, 32
    %v1681 = vpop.permute.xlu0 %1680
    %v1683 = vadd.f32 %v1673, %v1681
    %v1684 = vtanh.pop %v1683
    %1686 = vrot.lane.b32.xlu0 %v1684, 64
    %v1687 = vpop.permute.xlu0 %1686
    %v1689 = vmul.f32 %v1671, %v1687
    %1690 = vmatprep.subr.mxu0 0.0
    %1691 = vmatpush1.msra.mxu0 0.0
    %1692 = vmatprep.subr.mxu0 0.0
    %1693 = vmatpush1.msra.mxu0 0.0
    %1694 = vmatprep.subr.mxu0 0.0
    %1695 = vmatpush1.msra.mxu0 0.0
    %1696 = vmatprep.subr.mxu0 0.0
    %1697 = vmatpush1.msra.mxu0 0.0
    %1698 = vmatprep.subr.mxu0 0.0
    %1699 = vmatpush1.msra.mxu0 0.0
    %1700 = vmatprep.subr.mxu0 0.0
    %1701 = vmatpush1.msra.mxu0 0.0
    %1702 = vmatprep.subr.mxu0 0.0
    %1703 = vmatpush1.msra.mxu0 0.0
    %1704 = vmatprep.subr.mxu0 0.0
    %1705 = vmatpush1.msra.mxu0 0.0
    %1706 = vmatprep.subr.mxu0 0.0
    %1707 = vmatpush1.msra.mxu0 0.0
    %1708 = vmatprep.subr.mxu0 0.0
    %1709 = vmatpush1.msra.mxu0 0.0
    %1710 = vmatprep.subr.mxu0 0.0
    %1711 = vmatpush1.msra.mxu0 0.0
    %1712 = vmatprep.subr.mxu0 0.0
    %1713 = vmatpush1.msra.mxu0 0.0
    %1714 = vmatprep.subr.mxu0 0.0
    %1715 = vmatpush1.msra.mxu0 %v61
    %1716 = vmatprep.subr.mxu0 0.0
    %1717 = vmatpush1.msra.mxu0 %v60
    %1718 = vmatprep.subr.mxu0 0.0
    %1719 = vmatpush1.msra.mxu0 %v59
    %1720 = vmatprep.subr.mxu0 0.0
    %1721 = vmatpush1.msra.mxu0 %v58
    %1722 = vmatprep.subr.mxu0 0.0
    %1723 = vmatpush2.msra.mxu0 0.0
    %1724 = vmatprep.subr.mxu0 0.0
    %1725 = vmatpush2.msra.mxu0 0.0
    %1726 = vmatprep.subr.mxu0 0.0
    %1727 = vmatpush2.msra.mxu0 0.0
    %1728 = vmatprep.subr.mxu0 0.0
    %1729 = vmatpush2.msra.mxu0 0.0
    %1730 = vmatprep.subr.mxu0 0.0
    %1731 = vmatpush2.msra.mxu0 0.0
    %1732 = vmatprep.subr.mxu0 0.0
    %1733 = vmatpush2.msra.mxu0 0.0
    %1734 = vmatprep.subr.mxu0 0.0
    %1735 = vmatpush2.msra.mxu0 0.0
    %1736 = vmatprep.subr.mxu0 0.0
    %1737 = vmatpush2.msra.mxu0 0.0
    %1738 = vmatprep.subr.mxu0 0.0
    %1739 = vmatpush2.msra.mxu0 0.0
    %1740 = vmatprep.subr.mxu0 0.0
    %1741 = vmatpush2.msra.mxu0 0.0
    %1742 = vmatprep.subr.mxu0 0.0
    %1743 = vmatpush2.msra.mxu0 0.0
    %1744 = vmatprep.subr.mxu0 0.0
    %1745 = vmatpush2.msra.mxu0 0.0
    %1746 = vmatprep.subr.mxu0 0.0
    %1747 = vmatpush2.msra.mxu0 0.0
    %1748 = vmatprep.subr.mxu0 0.0
    %1749 = vmatpush2.msra.mxu0 0.0
    %1750 = vmatprep.subr.mxu0 0.0
    %1751 = vmatpush2.msra.mxu0 0.0
    %1752 = vmatprep.subr.mxu0 0.0
    %1753 = vmatpush2.msra.mxu0 0.0
    %1754 = vmatprep.mubr.f32.mxu0 0.0
    %1755 = vmatmul.mubr.f32.gmra.mxu0 %v1595
    %v1756 = vpop.f32.mrf.mxu0
    %v1757 = vadd.f32 %v347, %v1756
    %v1758 = vpop.f32.mrf.mxu0
    %1759 = vdwg.mxu0
    %v1760 = vsel %vm419, %v1589, 0
    %1762 = vmatprep.subr.mxu0 0.0
    %1763 = vmatpush1.msra.mxu0 0.0
    %1764 = vmatprep.subr.mxu0 0.0
    %1765 = vmatpush1.msra.mxu0 0.0
    %1766 = vmatprep.subr.mxu0 0.0
    %1767 = vmatpush1.msra.mxu0 0.0
    %1768 = vmatprep.subr.mxu0 0.0
    %1769 = vmatpush1.msra.mxu0 0.0
    %1770 = vmatprep.subr.mxu0 0.0
    %1771 = vmatpush1.msra.mxu0 0.0
    %1772 = vmatprep.subr.mxu0 0.0
    %1773 = vmatpush1.msra.mxu0 0.0
    %1774 = vmatprep.subr.mxu0 0.0
    %1775 = vmatpush1.msra.mxu0 0.0
    %1776 = vmatprep.subr.mxu0 0.0
    %1777 = vmatpush1.msra.mxu0 0.0
    %1778 = vmatprep.subr.mxu0 0.0
    %1779 = vmatpush1.msra.mxu0 0.0
    %1780 = vmatprep.subr.mxu0 0.0
    %1781 = vmatpush1.msra.mxu0 0.0
    %1782 = vmatprep.subr.mxu0 0.0
    %1783 = vmatpush1.msra.mxu0 0.0
    %1784 = vmatprep.subr.mxu0 0.0
    %1785 = vmatpush1.msra.mxu0 0.0
    %1786 = vmatprep.subr.mxu0 0.0
    %1787 = vmatpush1.msra.mxu0 0.0
    %1788 = vmatprep.subr.mxu0 0.0
    %1789 = vmatpush1.msra.mxu0 0.0
    %1790 = vmatprep.subr.mxu0 0.0
    %1791 = vmatpush1.msra.mxu0 %v63
    %1792 = vmatprep.subr.mxu0 0.0
    %1793 = vmatpush1.msra.mxu0 %v62
    %1794 = vmatprep.subr.mxu0 0.0
    %1795 = vmatpush2.msra.mxu0 0.0
    %1796 = vmatprep.subr.mxu0 0.0
    %1797 = vmatpush2.msra.mxu0 0.0
    %1798 = vmatprep.subr.mxu0 0.0
    %1799 = vmatpush2.msra.mxu0 0.0
    %1800 = vmatprep.subr.mxu0 0.0
    %1801 = vmatpush2.msra.mxu0 0.0
    %1802 = vmatprep.subr.mxu0 0.0
    %1803 = vmatpush2.msra.mxu0 0.0
    %1804 = vmatprep.subr.mxu0 0.0
    %1805 = vmatpush2.msra.mxu0 0.0
    %1806 = vmatprep.subr.mxu0 0.0
    %1807 = vmatpush2.msra.mxu0 0.0
    %1808 = vmatprep.subr.mxu0 0.0
    %1809 = vmatpush2.msra.mxu0 0.0
    %1810 = vmatprep.subr.mxu0 0.0
    %1811 = vmatpush2.msra.mxu0 0.0
    %1812 = vmatprep.subr.mxu0 0.0
    %1813 = vmatpush2.msra.mxu0 0.0
    %1814 = vmatprep.subr.mxu0 0.0
    %1815 = vmatpush2.msra.mxu0 0.0
    %1816 = vmatprep.subr.mxu0 0.0
    %1817 = vmatpush2.msra.mxu0 0.0
    %1818 = vmatprep.subr.mxu0 0.0
    %1819 = vmatpush2.msra.mxu0 0.0
    %1820 = vmatprep.subr.mxu0 0.0
    %1821 = vmatpush2.msra.mxu0 0.0
    %1822 = vmatprep.subr.mxu0 0.0
    %1823 = vmatpush2.msra.mxu0 0.0
    %1824 = vmatprep.subr.mxu0 0.0
    %1825 = vmatpush2.msra.mxu0 0.0
    %1826 = vmatprep.mubr.f32.mxu0 0.0
    %1827 = vmatmul.mubr.f32.gmra.mxu0 %v1760
    %v1828 = vpop.f32.mrf.mxu0
    %v1829 = vadd.f32 0.0, %v1828
    %v1830 = vpop.f32.mrf.mxu0
    %1831 = vdwg.mxu0
    %v1832 = vadd.f32 %v1757, %v1829
    %v1833 = vmul.f32 %v1832, 0.5
    %v1834 = vtanh.pop %v1833
    %v1835 = vmul.f32 %v1834, 0.5
    %v1836 = vadd.f32 %v1835, 0.5
    %v1837 = vtanh.pop %v1832
    %v1838 = vmul.f32 %v1836, %v1580
    %1840 = vrot.lane.b32.xlu0 %v1837, 96
    %v1841 = vpop.permute.xlu0 %1840
    %v1843 = vmul.f32 %v1836, %v1841
    %1845 = vrot.lane.b32.xlu0 %v1843, 16
    %v1846 = vpop.permute.xlu0 %1845
    %v1848 = vadd.f32 %v1838, %v1846
    %v1849 = vtanh.pop %v1848
    %1851 = vrot.lane.b32.xlu0 %v1849, 32
    %v1852 = vpop.permute.xlu0 %1851
    %v1854 = vmul.f32 %v1836, %v1852
    %1856 = vrot.lane.b32.xlu0 %v1854, 80
    %v1857 = vpop.permute.xlu0 %1856
    %1859 = vst.msk [vmem:[%s7 + $0x28] sm:$0xff] %vm419, %v1857
    %1861 = vrot.lane.b32.xlu0 %v1689, 32
    %v1862 = vpop.permute.xlu0 %1861
    %v1863 = vsel %vm148, %v1862, 0
    %1865 = vmatprep.subr.mxu0 0.0
    %1866 = vmatpush1.msra.mxu0 0.0
    %1867 = vmatprep.subr.mxu0 0.0
    %1868 = vmatpush1.msra.mxu0 0.0
    %1869 = vmatprep.subr.mxu0 0.0
    %1870 = vmatpush1.msra.mxu0 0.0
    %1871 = vmatprep.subr.mxu0 0.0
    %1872 = vmatpush1.msra.mxu0 0.0
    %1873 = vmatprep.subr.mxu0 0.0
    %1874 = vmatpush1.msra.mxu0 0.0
    %1875 = vmatprep.subr.mxu0 0.0
    %1876 = vmatpush1.msra.mxu0 0.0
    %1877 = vmatprep.subr.mxu0 0.0
    %1878 = vmatpush1.msra.mxu0 0.0
    %1879 = vmatprep.subr.mxu0 0.0
    %1880 = vmatpush1.msra.mxu0 0.0
    %1881 = vmatprep.subr.mxu0 0.0
    %1882 = vmatpush1.msra.mxu0 0.0
    %1883 = vmatprep.subr.mxu0 0.0
    %1884 = vmatpush1.msra.mxu0 0.0
    %1885 = vmatprep.subr.mxu0 0.0
    %1886 = vmatpush1.msra.mxu0 0.0
    %1887 = vmatprep.subr.mxu0 0.0
    %1888 = vmatpush1.msra.mxu0 0.0
    %1889 = vmatprep.subr.mxu0 0.0
    %1890 = vmatpush1.msra.mxu0 %v57
    %1891 = vmatprep.subr.mxu0 0.0
    %1892 = vmatpush1.msra.mxu0 %v56
    %1893 = vmatprep.subr.mxu0 0.0
    %1894 = vmatpush1.msra.mxu0 %v55
    %1895 = vmatprep.subr.mxu0 0.0
    %1896 = vmatpush1.msra.mxu0 %v54
    %1897 = vmatprep.subr.mxu0 0.0
    %1898 = vmatpush2.msra.mxu0 0.0
    %1899 = vmatprep.subr.mxu0 0.0
    %1900 = vmatpush2.msra.mxu0 0.0
    %1901 = vmatprep.subr.mxu0 0.0
    %1902 = vmatpush2.msra.mxu0 0.0
    %1903 = vmatprep.subr.mxu0 0.0
    %1904 = vmatpush2.msra.mxu0 0.0
    %1905 = vmatprep.subr.mxu0 0.0
    %1906 = vmatpush2.msra.mxu0 0.0
    %1907 = vmatprep.subr.mxu0 0.0
    %1908 = vmatpush2.msra.mxu0 0.0
    %1909 = vmatprep.subr.mxu0 0.0
    %1910 = vmatpush2.msra.mxu0 0.0
    %1911 = vmatprep.subr.mxu0 0.0
    %1912 = vmatpush2.msra.mxu0 0.0
    %1913 = vmatprep.subr.mxu0 0.0
    %1914 = vmatpush2.msra.mxu0 0.0
    %1915 = vmatprep.subr.mxu0 0.0
    %1916 = vmatpush2.msra.mxu0 0.0
    %1917 = vmatprep.subr.mxu0 0.0
    %1918 = vmatpush2.msra.mxu0 0.0
    %1919 = vmatprep.subr.mxu0 0.0
    %1920 = vmatpush2.msra.mxu0 0.0
    %1921 = vmatprep.subr.mxu0 0.0
    %1922 = vmatpush2.msra.mxu0 0.0
    %1923 = vmatprep.subr.mxu0 0.0
    %1924 = vmatpush2.msra.mxu0 0.0
    %1925 = vmatprep.subr.mxu0 0.0
    %1926 = vmatpush2.msra.mxu0 0.0
    %1927 = vmatprep.subr.mxu0 0.0
    %1928 = vmatpush2.msra.mxu0 0.0
    %1929 = vmatprep.mubr.f32.mxu0 0.0
    %1930 = vmatmul.mubr.f32.gmra.mxu0 %v1863
    %v1931 = vpop.f32.mrf.mxu0
    %v1932 = vadd.f32 0.0, %v1931
    %v1933 = vpop.f32.mrf.mxu0
    %1934 = vdwg.mxu0
    %v1935 = vadd.f32 %v145, %v1932
    %v1936 = vmul.f32 %v1935, 0.5
    %v1937 = vtanh.pop %v1936
    %v1938 = vmul.f32 %v1937, 0.5
    %v1939 = vadd.f32 %v1938, 0.5
    %v1940 = vtanh.pop %v1935
    %v1941 = vmul.f32 %v1939, %v1683
    %1943 = vrot.lane.b32.xlu0 %v1940, 64
    %v1944 = vpop.permute.xlu0 %1943
    %v1946 = vmul.f32 %v1939, %v1944
    %1948 = vrot.lane.b32.xlu0 %v1946, 32
    %v1949 = vpop.permute.xlu0 %1948
    %v1951 = vadd.f32 %v1941, %v1949
    %v1952 = vtanh.pop %v1951
    %1954 = vrot.lane.b32.xlu0 %v1952, 64
    %v1955 = vpop.permute.xlu0 %1954
    %v1957 = vmul.f32 %v1939, %v1955
    %1958 = vmatprep.subr.mxu0 0.0
    %1959 = vmatpush1.msra.mxu0 0.0
    %1960 = vmatprep.subr.mxu0 0.0
    %1961 = vmatpush1.msra.mxu0 0.0
    %1962 = vmatprep.subr.mxu0 0.0
    %1963 = vmatpush1.msra.mxu0 0.0
    %1964 = vmatprep.subr.mxu0 0.0
    %1965 = vmatpush1.msra.mxu0 0.0
    %1966 = vmatprep.subr.mxu0 0.0
    %1967 = vmatpush1.msra.mxu0 0.0
    %1968 = vmatprep.subr.mxu0 0.0
    %1969 = vmatpush1.msra.mxu0 0.0
    %1970 = vmatprep.subr.mxu0 0.0
    %1971 = vmatpush1.msra.mxu0 0.0
    %1972 = vmatprep.subr.mxu0 0.0
    %1973 = vmatpush1.msra.mxu0 0.0
    %1974 = vmatprep.subr.mxu0 0.0
    %1975 = vmatpush1.msra.mxu0 0.0
    %1976 = vmatprep.subr.mxu0 0.0
    %1977 = vmatpush1.msra.mxu0 0.0
    %1978 = vmatprep.subr.mxu0 0.0
    %1979 = vmatpush1.msra.mxu0 0.0
    %1980 = vmatprep.subr.mxu0 0.0
    %1981 = vmatpush1.msra.mxu0 0.0
    %1982 = vmatprep.subr.mxu0 0.0
    %1983 = vmatpush1.msra.mxu0 %v61
    %1984 = vmatprep.subr.mxu0 0.0
    %1985 = vmatpush1.msra.mxu0 %v60
    %1986 = vmatprep.subr.mxu0 0.0
    %1987 = vmatpush1.msra.mxu0 %v59
    %1988 = vmatprep.subr.mxu0 0.0
    %1989 = vmatpush1.msra.mxu0 %v58
    %1990 = vmatprep.subr.mxu0 0.0
    %1991 = vmatpush2.msra.mxu0 0.0
    %1992 = vmatprep.subr.mxu0 0.0
    %1993 = vmatpush2.msra.mxu0 0.0
    %1994 = vmatprep.subr.mxu0 0.0
    %1995 = vmatpush2.msra.mxu0 0.0
    %1996 = vmatprep.subr.mxu0 0.0
    %1997 = vmatpush2.msra.mxu0 0.0
    %1998 = vmatprep.subr.mxu0 0.0
    %1999 = vmatpush2.msra.mxu0 0.0
    %2000 = vmatprep.subr.mxu0 0.0
    %2001 = vmatpush2.msra.mxu0 0.0
    %2002 = vmatprep.subr.mxu0 0.0
    %2003 = vmatpush2.msra.mxu0 0.0
    %2004 = vmatprep.subr.mxu0 0.0
    %2005 = vmatpush2.msra.mxu0 0.0
    %2006 = vmatprep.subr.mxu0 0.0
    %2007 = vmatpush2.msra.mxu0 0.0
    %2008 = vmatprep.subr.mxu0 0.0
    %2009 = vmatpush2.msra.mxu0 0.0
    %2010 = vmatprep.subr.mxu0 0.0
    %2011 = vmatpush2.msra.mxu0 0.0
    %2012 = vmatprep.subr.mxu0 0.0
    %2013 = vmatpush2.msra.mxu0 0.0
    %2014 = vmatprep.subr.mxu0 0.0
    %2015 = vmatpush2.msra.mxu0 0.0
    %2016 = vmatprep.subr.mxu0 0.0
    %2017 = vmatpush2.msra.mxu0 0.0
    %2018 = vmatprep.subr.mxu0 0.0
    %2019 = vmatpush2.msra.mxu0 0.0
    %2020 = vmatprep.subr.mxu0 0.0
    %2021 = vmatpush2.msra.mxu0 0.0
    %2022 = vmatprep.mubr.f32.mxu0 0.0
    %2023 = vmatmul.mubr.f32.gmra.mxu0 %v1863
    %v2024 = vpop.f32.mrf.mxu0
    %v2025 = vadd.f32 %v347, %v2024
    %v2026 = vpop.f32.mrf.mxu0
    %2027 = vdwg.mxu0
    %v2028 = vsel %vm419, %v1857, 0
    %2030 = vmatprep.subr.mxu0 0.0
    %2031 = vmatpush1.msra.mxu0 0.0
    %2032 = vmatprep.subr.mxu0 0.0
    %2033 = vmatpush1.msra.mxu0 0.0
    %2034 = vmatprep.subr.mxu0 0.0
    %2035 = vmatpush1.msra.mxu0 0.0
    %2036 = vmatprep.subr.mxu0 0.0
    %2037 = vmatpush1.msra.mxu0 0.0
    %2038 = vmatprep.subr.mxu0 0.0
    %2039 = vmatpush1.msra.mxu0 0.0
    %2040 = vmatprep.subr.mxu0 0.0
    %2041 = vmatpush1.msra.mxu0 0.0
    %2042 = vmatprep.subr.mxu0 0.0
    %2043 = vmatpush1.msra.mxu0 0.0
    %2044 = vmatprep.subr.mxu0 0.0
    %2045 = vmatpush1.msra.mxu0 0.0
    %2046 = vmatprep.subr.mxu0 0.0
    %2047 = vmatpush1.msra.mxu0 0.0
    %2048 = vmatprep.subr.mxu0 0.0
    %2049 = vmatpush1.msra.mxu0 0.0
    %2050 = vmatprep.subr.mxu0 0.0
    %2051 = vmatpush1.msra.mxu0 0.0
    %2052 = vmatprep.subr.mxu0 0.0
    %2053 = vmatpush1.msra.mxu0 0.0
    %2054 = vmatprep.subr.mxu0 0.0
    %2055 = vmatpush1.msra.mxu0 0.0
    %2056 = vmatprep.subr.mxu0 0.0
    %2057 = vmatpush1.msra.mxu0 0.0
    %2058 = vmatprep.subr.mxu0 0.0
    %2059 = vmatpush1.msra.mxu0 %v63
    %2060 = vmatprep.subr.mxu0 0.0
    %2061 = vmatpush1.msra.mxu0 %v62
    %2062 = vmatprep.subr.mxu0 0.0
    %2063 = vmatpush2.msra.mxu0 0.0
    %2064 = vmatprep.subr.mxu0 0.0
    %2065 = vmatpush2.msra.mxu0 0.0
    %2066 = vmatprep.subr.mxu0 0.0
    %2067 = vmatpush2.msra.mxu0 0.0
    %2068 = vmatprep.subr.mxu0 0.0
    %2069 = vmatpush2.msra.mxu0 0.0
    %2070 = vmatprep.subr.mxu0 0.0
    %2071 = vmatpush2.msra.mxu0 0.0
    %2072 = vmatprep.subr.mxu0 0.0
    %2073 = vmatpush2.msra.mxu0 0.0
    %2074 = vmatprep.subr.mxu0 0.0
    %2075 = vmatpush2.msra.mxu0 0.0
    %2076 = vmatprep.subr.mxu0 0.0
    %2077 = vmatpush2.msra.mxu0 0.0
    %2078 = vmatprep.subr.mxu0 0.0
    %2079 = vmatpush2.msra.mxu0 0.0
    %2080 = vmatprep.subr.mxu0 0.0
    %2081 = vmatpush2.msra.mxu0 0.0
    %2082 = vmatprep.subr.mxu0 0.0
    %2083 = vmatpush2.msra.mxu0 0.0
    %2084 = vmatprep.subr.mxu0 0.0
    %2085 = vmatpush2.msra.mxu0 0.0
    %2086 = vmatprep.subr.mxu0 0.0
    %2087 = vmatpush2.msra.mxu0 0.0
    %2088 = vmatprep.subr.mxu0 0.0
    %2089 = vmatpush2.msra.mxu0 0.0
    %2090 = vmatprep.subr.mxu0 0.0
    %2091 = vmatpush2.msra.mxu0 0.0
    %2092 = vmatprep.subr.mxu0 0.0
    %2093 = vmatpush2.msra.mxu0 0.0
    %2094 = vmatprep.mubr.f32.mxu0 0.0
    %2095 = vmatmul.mubr.f32.gmra.mxu0 %v2028
    %v2096 = vpop.f32.mrf.mxu0
    %v2097 = vadd.f32 0.0, %v2096
    %v2098 = vpop.f32.mrf.mxu0
    %2099 = vdwg.mxu0
    %v2100 = vadd.f32 %v2025, %v2097
    %v2101 = vmul.f32 %v2100, 0.5
    %v2102 = vtanh.pop %v2101
    %v2103 = vmul.f32 %v2102, 0.5
    %v2104 = vadd.f32 %v2103, 0.5
    %v2105 = vtanh.pop %v2100
    %v2106 = vmul.f32 %v2104, %v1848
    %2108 = vrot.lane.b32.xlu0 %v2105, 96
    %v2109 = vpop.permute.xlu0 %2108
    %v2111 = vmul.f32 %v2104, %v2109
    %2113 = vrot.lane.b32.xlu0 %v2111, 16
    %v2114 = vpop.permute.xlu0 %2113
    %v2116 = vadd.f32 %v2106, %v2114
    %v2117 = vtanh.pop %v2116
    %2119 = vrot.lane.b32.xlu0 %v2117, 32
    %v2120 = vpop.permute.xlu0 %2119
    %v2122 = vmul.f32 %v2104, %v2120
    %2124 = vrot.lane.b32.xlu0 %v2122, 80
    %v2125 = vpop.permute.xlu0 %2124
    %2127 = vst.msk [vmem:[%s7 + $0x30] sm:$0xff] %vm419, %v2125
    %2129 = vrot.lane.b32.xlu0 %v1957, 32
    %v2130 = vpop.permute.xlu0 %2129
    %v2131 = vsel %vm148, %v2130, 0
    %2133 = vmatprep.subr.mxu0 0.0
    %2134 = vmatpush1.msra.mxu0 0.0
    %2135 = vmatprep.subr.mxu0 0.0
    %2136 = vmatpush1.msra.mxu0 0.0
    %2137 = vmatprep.subr.mxu0 0.0
    %2138 = vmatpush1.msra.mxu0 0.0
    %2139 = vmatprep.subr.mxu0 0.0
    %2140 = vmatpush1.msra.mxu0 0.0
    %2141 = vmatprep.subr.mxu0 0.0
    %2142 = vmatpush1.msra.mxu0 0.0
    %2143 = vmatprep.subr.mxu0 0.0
    %2144 = vmatpush1.msra.mxu0 0.0
    %2145 = vmatprep.subr.mxu0 0.0
    %2146 = vmatpush1.msra.mxu0 0.0
    %2147 = vmatprep.subr.mxu0 0.0
    %2148 = vmatpush1.msra.mxu0 0.0
    %2149 = vmatprep.subr.mxu0 0.0
    %2150 = vmatpush1.msra.mxu0 0.0
    %2151 = vmatprep.subr.mxu0 0.0
    %2152 = vmatpush1.msra.mxu0 0.0
    %2153 = vmatprep.subr.mxu0 0.0
    %2154 = vmatpush1.msra.mxu0 0.0
    %2155 = vmatprep.subr.mxu0 0.0
    %2156 = vmatpush1.msra.mxu0 0.0
    %2157 = vmatprep.subr.mxu0 0.0
    %2158 = vmatpush1.msra.mxu0 %v61
    %2159 = vmatprep.subr.mxu0 0.0
    %2160 = vmatpush1.msra.mxu0 %v60
    %2161 = vmatprep.subr.mxu0 0.0
    %2162 = vmatpush1.msra.mxu0 %v59
    %2163 = vmatprep.subr.mxu0 0.0
    %2164 = vmatpush1.msra.mxu0 %v58
    %2165 = vmatprep.subr.mxu0 0.0
    %2166 = vmatpush2.msra.mxu0 0.0
    %2167 = vmatprep.subr.mxu0 0.0
    %2168 = vmatpush2.msra.mxu0 0.0
    %2169 = vmatprep.subr.mxu0 0.0
    %2170 = vmatpush2.msra.mxu0 0.0
    %2171 = vmatprep.subr.mxu0 0.0
    %2172 = vmatpush2.msra.mxu0 0.0
    %2173 = vmatprep.subr.mxu0 0.0
    %2174 = vmatpush2.msra.mxu0 0.0
    %2175 = vmatprep.subr.mxu0 0.0
    %2176 = vmatpush2.msra.mxu0 0.0
    %2177 = vmatprep.subr.mxu0 0.0
    %2178 = vmatpush2.msra.mxu0 0.0
    %2179 = vmatprep.subr.mxu0 0.0
    %2180 = vmatpush2.msra.mxu0 0.0
    %2181 = vmatprep.subr.mxu0 0.0
    %2182 = vmatpush2.msra.mxu0 0.0
    %2183 = vmatprep.subr.mxu0 0.0
    %2184 = vmatpush2.msra.mxu0 0.0
    %2185 = vmatprep.subr.mxu0 0.0
    %2186 = vmatpush2.msra.mxu0 0.0
    %2187 = vmatprep.subr.mxu0 0.0
    %2188 = vmatpush2.msra.mxu0 0.0
    %2189 = vmatprep.subr.mxu0 0.0
    %2190 = vmatpush2.msra.mxu0 0.0
    %2191 = vmatprep.subr.mxu0 0.0
    %2192 = vmatpush2.msra.mxu0 0.0
    %2193 = vmatprep.subr.mxu0 0.0
    %2194 = vmatpush2.msra.mxu0 0.0
    %2195 = vmatprep.subr.mxu0 0.0
    %2196 = vmatpush2.msra.mxu0 0.0
    %2197 = vmatprep.mubr.f32.mxu0 0.0
    %2198 = vmatmul.mubr.f32.gmra.mxu0 %v2131
    %v2199 = vpop.f32.mrf.mxu0
    %v2200 = vadd.f32 %v347, %v2199
    %v2201 = vpop.f32.mrf.mxu0
    %2202 = vdwg.mxu0
    %v2203 = vsel %vm419, %v2125, 0
    %2205 = vmatprep.subr.mxu0 0.0
    %2206 = vmatpush1.msra.mxu0 0.0
    %2207 = vmatprep.subr.mxu0 0.0
    %2208 = vmatpush1.msra.mxu0 0.0
    %2209 = vmatprep.subr.mxu0 0.0
    %2210 = vmatpush1.msra.mxu0 0.0
    %2211 = vmatprep.subr.mxu0 0.0
    %2212 = vmatpush1.msra.mxu0 0.0
    %2213 = vmatprep.subr.mxu0 0.0
    %2214 = vmatpush1.msra.mxu0 0.0
    %2215 = vmatprep.subr.mxu0 0.0
    %2216 = vmatpush1.msra.mxu0 0.0
    %2217 = vmatprep.subr.mxu0 0.0
    %2218 = vmatpush1.msra.mxu0 0.0
    %2219 = vmatprep.subr.mxu0 0.0
    %2220 = vmatpush1.msra.mxu0 0.0
    %2221 = vmatprep.subr.mxu0 0.0
    %2222 = vmatpush1.msra.mxu0 0.0
    %2223 = vmatprep.subr.mxu0 0.0
    %2224 = vmatpush1.msra.mxu0 0.0
    %2225 = vmatprep.subr.mxu0 0.0
    %2226 = vmatpush1.msra.mxu0 0.0
    %2227 = vmatprep.subr.mxu0 0.0
    %2228 = vmatpush1.msra.mxu0 0.0
    %2229 = vmatprep.subr.mxu0 0.0
    %2230 = vmatpush1.msra.mxu0 0.0
    %2231 = vmatprep.subr.mxu0 0.0
    %2232 = vmatpush1.msra.mxu0 0.0
    %2233 = vmatprep.subr.mxu0 0.0
    %2234 = vmatpush1.msra.mxu0 %v63
    %2235 = vmatprep.subr.mxu0 0.0
    %2236 = vmatpush1.msra.mxu0 %v62
    %2237 = vmatprep.subr.mxu0 0.0
    %2238 = vmatpush2.msra.mxu0 0.0
    %2239 = vmatprep.subr.mxu0 0.0
    %2240 = vmatpush2.msra.mxu0 0.0
    %2241 = vmatprep.subr.mxu0 0.0
    %2242 = vmatpush2.msra.mxu0 0.0
    %2243 = vmatprep.subr.mxu0 0.0
    %2244 = vmatpush2.msra.mxu0 0.0
    %2245 = vmatprep.subr.mxu0 0.0
    %2246 = vmatpush2.msra.mxu0 0.0
    %2247 = vmatprep.subr.mxu0 0.0
    %2248 = vmatpush2.msra.mxu0 0.0
    %2249 = vmatprep.subr.mxu0 0.0
    %2250 = vmatpush2.msra.mxu0 0.0
    %2251 = vmatprep.subr.mxu0 0.0
    %2252 = vmatpush2.msra.mxu0 0.0
    %2253 = vmatprep.subr.mxu0 0.0
    %2254 = vmatpush2.msra.mxu0 0.0
    %2255 = vmatprep.subr.mxu0 0.0
    %2256 = vmatpush2.msra.mxu0 0.0
    %2257 = vmatprep.subr.mxu0 0.0
    %2258 = vmatpush2.msra.mxu0 0.0
    %2259 = vmatprep.subr.mxu0 0.0
    %2260 = vmatpush2.msra.mxu0 0.0
    %2261 = vmatprep.subr.mxu0 0.0
    %2262 = vmatpush2.msra.mxu0 0.0
    %2263 = vmatprep.subr.mxu0 0.0
    %2264 = vmatpush2.msra.mxu0 0.0
    %2265 = vmatprep.subr.mxu0 0.0
    %2266 = vmatpush2.msra.mxu0 0.0
    %2267 = vmatprep.subr.mxu0 0.0
    %2268 = vmatpush2.msra.mxu0 0.0
    %2269 = vmatprep.mubr.f32.mxu0 0.0
    %2270 = vmatmul.mubr.f32.gmra.mxu0 %v2203
    %v2271 = vpop.f32.mrf.mxu0
    %v2272 = vadd.f32 0.0, %v2271
    %v2273 = vpop.f32.mrf.mxu0
    %2274 = vdwg.mxu0
    %v2275 = vadd.f32 %v2200, %v2272
    %v2276 = vmul.f32 %v2275, 0.5
    %v2277 = vtanh.pop %v2276
    %v2278 = vmul.f32 %v2277, 0.5
    %v2279 = vadd.f32 %v2278, 0.5
    %v2280 = vtanh.pop %v2275
    %v2281 = vmul.f32 %v2279, %v2116
    %2283 = vrot.lane.b32.xlu0 %v2280, 96
    %v2284 = vpop.permute.xlu0 %2283
    %v2286 = vmul.f32 %v2279, %v2284
    %2288 = vrot.lane.b32.xlu0 %v2286, 16
    %v2289 = vpop.permute.xlu0 %2288
    %v2291 = vadd.f32 %v2281, %v2289
    %v2292 = vtanh.pop %v2291
    %2294 = vrot.lane.b32.xlu0 %v2292, 32
    %v2295 = vpop.permute.xlu0 %2294
    %v2297 = vmul.f32 %v2279, %v2295
    %2299 = vrot.lane.b32.xlu0 %v2297, 80
    %v2300 = vpop.permute.xlu0 %2299
    %2302 = vst.msk [vmem:[%s7 + $0x38] sm:$0xff] %vm419, %v2300
    // Predicated region
    $region38: #{lstm_variational_decoder_forward.1} parent=1 // pred_check
      _
    $region39: #{lstm_variational_decoder_forward.1} parent=1 // pred_check_branch
      %2304 = sbr.rel (0) target = $region41
    $region40: #{lstm_variational_decoder_forward.1} parent=1 // pred_region
      _
    $region41: #{lstm_variational_decoder_forward.1} parent=1 // pred_fallthru
      _
    // Predicated region
    $region42: #{lstm_variational_decoder_forward.1} parent=1 // pred_check
      _
    $region43: #{lstm_variational_decoder_forward.1} parent=1 // pred_check_branch
      %2306 = sbr.rel (0) target = $region45
    $region44: #{lstm_variational_decoder_forward.1} parent=1 // pred_region
      _
    $region45: #{lstm_variational_decoder_forward.1} parent=1 // pred_fallthru
      _
    %2307 = vsyncpa [#allocation3], 1
    %2308 = vsyncpa [#allocation5], 1

</llo_original>
